<compile_context>
chip_gen: v6e
topology: v6e:2x2x1
jax: 0.10.0
libtpu: 0.0.40
codegen_flags: <defaults>
</compile_context>

<pallas_src>
import functools

import jax
import jax.numpy as jnp
from jax.experimental import pallas as pl
from jax.experimental.pallas import tpu as pltpu


def _round_up(n, m):
    return -(-n // m) * m


def _lvae_kernel(L, P_in, P_h, P_z, *refs):
    """One batch tile of the full LVAE forward.

    Refs (L > 1):
      xin_ref   : (TILE_B, P_in + L*P_z)   segment 0 = x, segments 1..L = eps_i
      w_in_ref  : (P_in, P_h)              encoder level-0 W1
      wh_enc_ref: (L, P_h, 2*P_z)          fused (mu | log_var) encoder heads
      w_final_ref: (P_z, P_in)             final projection
      b_ref     : (pad8(4L-1), BW)         all biases, one row each
      w1_z_ref  : (2*(L-1), P_z, P_h)      enc W1 levels 1.. then dec W1 levels
      wh_dec_ref: (L-1, P_h, P_z)          decoder mu heads
      out_ref   : (TILE_B, P_in + 3L*P_z)  x_recon | mu_i | log_var_i | z_i
    For L == 1 the w1_z / wh_dec slabs are absent.
    """
    if L > 1:
        (xin_ref, w_in_ref, wh_enc_ref, w_final_ref, b_ref,
         w1_z_ref, wh_dec_ref, out_ref) = refs
    else:
        xin_ref, w_in_ref, wh_enc_ref, w_final_ref, b_ref, out_ref = refs
        w1_z_ref = wh_dec_ref = None

    def bias(row, width):
        # Static row / lane-aligned width -> broadcast bias row, no masking.
        return b_ref[row:row + 1, :width]

    # ---- Bottom-up encoder ----
    h = xin_ref[:, 0:P_in]                       # x segment (lane-padded)
    mus, zs = [], []
    wz = 0                                       # index into the (P_z, P_h) W1 slab
    for i in range(L):
        if i == 0:
            pre = jnp.dot(h, w_in_ref[...], preferred_element_type=jnp.float32)
        else:
            pre = jnp.dot(h, w1_z_ref[wz], preferred_element_type=jnp.float32)
            wz += 1
        h1 = jnp.maximum(pre + bias(i, P_h), 0.0)            # Linear + ReLU
        # Fused (mu | log_var) head: single (TILE_B,P_h)@(P_h,2*P_z) matmul.
        head = (jnp.dot(h1, wh_enc_ref[i], preferred_element_type=jnp.float32)
                + bias(L + i, 2 * P_z))
        mu = head[:, :P_z]                       # split at lane-tile boundary
        lv = head[:, P_z:]
        eps = xin_ref[:, P_in + i * P_z:P_in + (i + 1) * P_z]
        z = mu + eps * jnp.exp(0.5 * lv)         # reparameterize (f32 VPU/EUP)
        out_ref[:, P_in + i * P_z:P_in + (i + 1) * P_z] = mu
        out_ref[:, P_in + (L + i) * P_z:P_in + (L + i + 1) * P_z] = lv
        out_ref[:, P_in + (2 * L + i) * P_z:P_in + (2 * L + i + 1) * P_z] = z
        mus.append(mu)
        zs.append(z)
        h = mu

    # ---- Top-down decoder ----
    h = zs[0]                                    # live value; no VMEM re-load
    for i in range(L - 1):
        pre = jnp.dot(h, w1_z_ref[wz], preferred_element_type=jnp.float32)
        wz += 1
        h1 = jnp.maximum(pre + bias(2 * L + i, P_h), 0.0)
        mu_dec = (jnp.dot(h1, wh_dec_ref[i], preferred_element_type=jnp.float32)
                  + bias(3 * L - 1 + i, P_z))    # only the mu half is used
        h = (mus[i + 1] + mu_dec) * 0.5          # in-register encoder mu reuse

    # Final projection -> x_recon segment.
    out_ref[:, 0:P_in] = (jnp.dot(h, w_final_ref[...],
                                  preferred_element_type=jnp.float32)
                          + bias(4 * L - 2, P_in))


def init_lvae_params(key, input_dim, hidden_dims, latent_dims):
    """Deterministic parameter init (weights as [in, out], biases as [1, out])."""
    params = {"enc": [], "dec": []}

    def linear(key, fan_in, fan_out):
        kw, kb = jax.random.split(key)
        bound = 1.0 / jnp.sqrt(jnp.float32(fan_in))
        W = jax.random.uniform(kw, (fan_in, fan_out), jnp.float32, -bound, bound)
        b = jax.random.uniform(kb, (1, fan_out), jnp.float32, -bound, bound)
        return W, b

    keys = jax.random.split(key, 4 * len(hidden_dims) + 2)
    ki = 0

    # Bottom-up encoder.
    prev = input_dim
    for h_dim, z_dim in zip(hidden_dims, latent_dims):
        W1, b1 = linear(keys[ki], prev, h_dim); ki += 1
        W2, b2 = linear(keys[ki], h_dim, 2 * z_dim); ki += 1
        params["enc"].append((W1, b1, W2, b2))
        prev = z_dim

    # Top-down decoder: hidden_dims reversed, starting from latent_dims[0].
    hidden_rev = hidden_dims[::-1]
    prev = latent_dims[0]
    for h_dim, z_dim in zip(hidden_rev[1:], latent_dims[1:]):
        W1, b1 = linear(keys[ki], prev, h_dim); ki += 1
        W2, b2 = linear(keys[ki], h_dim, 2 * z_dim); ki += 1
        params["dec"].append((W1, b1, W2, b2))
        prev = z_dim
    params["final"] = linear(keys[ki], prev, input_dim)
    return params


def _pack_operands(x, eps_list, params, input_dim, latent_dims,
                   P_in, P_h, P_z, B_pad):
    """Build the lane-dense input slab + shape-homogeneous weight/bias slabs."""
    L = len(latent_dims)
    B = x.shape[0]

    # Input slab: [B_pad, P_in + L*P_z]; segment 0 = x, segment 1+i = eps_i.
    in_w = P_in + L * P_z
    xin = jnp.zeros((B_pad, in_w), jnp.float32)
    xin = xin.at[:B, :input_dim].set(x)
    for i, e in enumerate(eps_list):
        c0 = P_in + i * P_z
        xin = xin.at[:B, c0:c0 + latent_dims[i]].set(e)

    def pad2(W, rows, cols):
        return jnp.zeros((rows, cols), jnp.float32).at[:W.shape[0], :W.shape[1]].set(W)

    # Bias slab: one row per linear layer, zero-padded to a common lane width.
    BW = max(P_h, 2 * P_z, P_in)
    nb = 4 * L - 1
    nb_pad = _round_up(nb, 8)
    b_slab = jnp.zeros((nb_pad, BW), jnp.float32)

    def set_bias(b, row, vec, col0=0):
        v = vec.reshape(-1)
        return b.at[row, col0:col0 + v.shape[0]].set(v)

    wh_enc, w1_z, wh_dec = [], [], []
    w_in = None

    # Encoder: W1 (role-padded) + fused (mu | log_var) head per level.
    for i, (W1, b1, W2, b2) in enumerate(params["enc"]):
        z = latent_dims[i]
        if i == 0:
            w_in = pad2(W1, P_in, P_h)
        else:
            w1_z.append(pad2(W1, P_z, P_h))
        b_slab = set_bias(b_slab, i, b1)
        wh = jnp.zeros((P_h, 2 * P_z), jnp.float32)
        wh = wh.at[:W2.shape[0], :z].set(W2[:, :z])          # mu half
        wh = wh.at[:W2.shape[0], P_z:P_z + z].set(W2[:, z:])  # log_var half
        wh_enc.append(wh)
        b_slab = set_bias(b_slab, L + i, b2[:, :z])
        b_slab = set_bias(b_slab, L + i, b2[:, z:], col0=P_z)

    # Decoder: W1 + mu head per level (log_var half is unused in the module).
    for i, (W1, b1, W2, b2) in enumerate(params["dec"]):
        z = latent_dims[i + 1]
        w1_z.append(pad2(W1, P_z, P_h))
        b_slab = set_bias(b_slab, 2 * L + i, b1)
        wh_dec.append(pad2(W2[:, :z], P_h, P_z))
        b_slab = set_bias(b_slab, 3 * L - 1 + i, b2[:, :z])

    # Final projection.
    Wf, bf = params["final"]
    w_final = pad2(Wf, P_z, P_in)
    b_slab = set_bias(b_slab, 4 * L - 2, bf)

    ops = {
        "xin": xin,
        "w_in": w_in,
        "wh_enc": jnp.stack(wh_enc),           # (L, P_h, 2*P_z)
        "w_final": w_final,                    # (P_z, P_in)
        "b": b_slab,                           # (pad8(4L-1), BW)
    }
    if L > 1:
        ops["w1_z"] = jnp.stack(w1_z)          # (2*(L-1), P_z, P_h)
        ops["wh_dec"] = jnp.stack(wh_dec)      # (L-1, P_h, P_z)
    return ops


def lvae_forward(x, eps_list, params, input_dim, hidden_dims, latent_dims,
                 *, tile_b=None):
    L = len(hidden_dims)
    B = x.shape[0]

    # Per-role padding (no single global P -> no quadratic FLOP/VMEM waste
    # when the feature dims are heterogeneous).
    P_in = _round_up(input_dim, 128)
    P_h = _round_up(max(hidden_dims), 128)
    P_z = _round_up(max(latent_dims), 128)

    if tile_b is None:
        b8 = _round_up(B, 8)
        tile_b = min(512, b8)
        # Prefer >= 2 grid steps so the "parallel" batch axis can shard across
        # v7x's two TensorCores (v5e/v6e have one TC; this is harmless there).
        if tile_b == b8 and b8 >= 16:
            tile_b = _round_up(b8 // 2, 8)
    B_pad = _round_up(B, tile_b)

    ops = _pack_operands(x, eps_list, params, input_dim, latent_dims,
                         P_in, P_h, P_z, B_pad)

    in_w = P_in + L * P_z
    out_w = P_in + 3 * L * P_z

    # Grid-invariant weight/bias slabs: whole-array, single-buffered VMEM
    # residents (loaded once, no per-step DMA, no double residency).
    weight_spec = pl.BlockSpec(memory_space=pltpu.MemorySpace.VMEM)
    inputs = [ops["xin"], ops["w_in"], ops["wh_enc"], ops["w_final"], ops["b"]]
    in_specs = [
        pl.BlockSpec((tile_b, in_w), lambda b: (b, 0)),   # x | eps slab (pipelined)
        weight_spec, weight_spec, weight_spec, weight_spec,
    ]
    if L > 1:
        inputs += [ops["w1_z"], ops["wh_dec"]]
        in_specs += [weight_spec, weight_spec]

    # VMEM budget from actual operand sizes: double-buffered in/out tiles plus
    # single-buffered resident slabs, with a small scratch margin.
    w_bytes = sum(int(v.size) * 4 for k, v in ops.items() if k != "xin")
    need = 4 * (2 * tile_b * in_w + 2 * tile_b * out_w) + w_bytes
    vmem_limit = int(min(max(need + (2 << 20), 8 << 20), 64 << 20))

    # Advisory cost estimate (padded-shape matmul FLOPs, exp count, HBM bytes).
    flops_row = 2 * (P_in * P_h + P_h * 2 * P_z
                     + (L - 1) * (P_z * P_h + P_h * 2 * P_z)
                     + (L - 1) * (P_z * P_h + P_h * P_z)
                     + P_z * P_in)
    cost = pl.CostEstimate(
        flops=int(flops_row * B_pad),
        transcendentals=int(B_pad * L * P_z),
        bytes_accessed=int(4 * B_pad * (in_w + out_w) + w_bytes),
    )

    kernel = functools.partial(_lvae_kernel, L, P_in, P_h, P_z)
    out = pl.pallas_call(
        kernel,
        out_shape=jax.ShapeDtypeStruct((B_pad, out_w), jnp.float32),
        grid=(B_pad // tile_b,),
        in_specs=in_specs,
        out_specs=pl.BlockSpec((tile_b, out_w), lambda b: (b, 0)),
        compiler_params=pltpu.CompilerParams(
            dimension_semantics=("parallel",),
            vmem_limit_bytes=vmem_limit),
        cost_estimate=cost,
    )(*inputs)

    # Split the lane-dense output slab back into the module's outputs.
    x_recon = out[:B, 0:input_dim]
    mus = [out[:B, P_in + i * P_z:P_in + i * P_z + latent_dims[i]]
           for i in range(L)]
    lvs = [out[:B, P_in + (L + i) * P_z:P_in + (L + i) * P_z + latent_dims[i]]
           for i in range(L)]
    zs = [out[:B, P_in + (2 * L + i) * P_z:P_in + (2 * L + i) * P_z + latent_dims[i]]
          for i in range(L)]
    return x_recon, list(zip(mus, lvs)), zs


def lvae_forward_ref(x, eps_list, params, input_dim, hidden_dims, latent_dims):
    """Pure-JAX reference mirroring the PyTorch module (HIGHEST-precision matmuls)."""
    hi = jax.lax.Precision.HIGHEST
    stats, zs = [], []
    h = x
    for i, (W1, b1, W2, b2) in enumerate(params["enc"]):
        h1 = jnp.maximum(jnp.dot(h, W1, precision=hi) + b1, 0.0)
        out = jnp.dot(h1, W2, precision=hi) + b2
        zdim = latent_dims[i]
        mu, log_var = out[:, :zdim], out[:, zdim:]
        stats.append((mu, log_var))
        zs.append(mu + eps_list[i] * jnp.exp(0.5 * log_var))
        h = mu
    h = zs[0]
    for i, (W1, b1, W2, b2) in enumerate(params["dec"]):
        h1 = jnp.maximum(jnp.dot(h, W1, precision=hi) + b1, 0.0)
        out = jnp.dot(h1, W2, precision=hi) + b2
        zdim = latent_dims[i + 1]
        mu_dec = out[:, :zdim]
        h = (stats[i + 1][0] + mu_dec) / 2
    Wf, bf = params["final"]
    return jnp.dot(h, Wf, precision=hi) + bf, stats, zs


if __name__ == "__main__":
    # Small config consistent with the module: 2 ladder levels.
    batch = 16
    input_dim = 16
    hidden_dims = [32, 24]
    latent_dims = [16, 8]

    key = jax.random.PRNGKey(0)
    k_param, k_x, k_eps = jax.random.split(key, 3)
    params = init_lvae_params(k_param, input_dim, hidden_dims, latent_dims)

    x = jax.random.normal(k_x, (batch, input_dim), jnp.float32)
    eps_keys = jax.random.split(k_eps, len(latent_dims))
    # TODO(synk): torch.randn_like is replaced by host-drawn eps passed into
    # the kernel (deterministic; matches the pure-JAX reference exactly).
    eps_list = [
        jax.random.normal(eps_keys[i], (batch, latent_dims[i]), jnp.float32)
        for i in range(len(latent_dims))
    ]

    # Default tile_b auto-split -> tile_b=8, grid=(2,) at this toy batch,
    # exercising the parallel batch grid (>= 2 steps for v7x dual-TC sharding).
    x_recon, encoder_stats, z_list = lvae_forward(
        x, eps_list, params, input_dim, hidden_dims, latent_dims)
    jax.block_until_ready(x_recon)

    # Cross-check against the pure-JAX reference.
    xr_ref, stats_ref, z_ref = lvae_forward_ref(
        x, eps_list, params, input_dim, hidden_dims, latent_dims)
    assert jnp.allclose(x_recon, xr_ref, atol=1e-5, rtol=1e-5)
    for (mu, lv), (mu_r, lv_r) in zip(encoder_stats, stats_ref):
        assert jnp.allclose(mu, mu_r, atol=1e-5, rtol=1e-5)
        assert jnp.allclose(lv, lv_r, atol=1e-5, rtol=1e-5)
    for z, zr in zip(z_list, z_ref):
        assert jnp.allclose(z, zr, atol=1e-5, rtol=1e-5)

    print("KERNEL_OK")
</pallas_src>

<mosaic_0001>
module attributes {stable_mosaic.version = 11 : i64} {
  func.func @_lvae_kernel(%arg0: i32, %arg1: memref<8x384xf32, #tpu.memory_space<vmem>>, %arg2: memref<128x128xf32, #tpu.memory_space<vmem>>, %arg3: memref<2x128x256xf32, #tpu.memory_space<vmem>>, %arg4: memref<128x128xf32, #tpu.memory_space<vmem>>, %arg5: memref<8x256xf32, #tpu.memory_space<vmem>>, %arg6: memref<2x128x128xf32, #tpu.memory_space<vmem>>, %arg7: memref<1x128x128xf32, #tpu.memory_space<vmem>>, %arg8: memref<8x896xf32, #tpu.memory_space<vmem>>) attributes {dimension_semantics = [#tpu.dimension_semantics<parallel>], iteration_bounds = array<i64: 2>, scalar_prefetch = 0 : i64, scratch_operands = 0 : i64, tpu.core_type = #tpu.core_type<tc>, window_params = [{transform_indices = @transform_0, window_bounds = array<i64: 8, 384>}, {pipeline_mode = #tpu.pipeline_mode<synchronous>, transform_indices = @transform_1, window_bounds = array<i64: 128, 128>}, {pipeline_mode = #tpu.pipeline_mode<synchronous>, transform_indices = @transform_2, window_bounds = array<i64: 2, 128, 256>}, {pipeline_mode = #tpu.pipeline_mode<synchronous>, transform_indices = @transform_3, window_bounds = array<i64: 128, 128>}, {pipeline_mode = #tpu.pipeline_mode<synchronous>, transform_indices = @transform_4, window_bounds = array<i64: 8, 256>}, {pipeline_mode = #tpu.pipeline_mode<synchronous>, transform_indices = @transform_5, window_bounds = array<i64: 2, 128, 128>}, {pipeline_mode = #tpu.pipeline_mode<synchronous>, transform_indices = @transform_6, window_bounds = array<i64: 1, 128, 128>}, {transform_indices = @transform_7, window_bounds = array<i64: 8, 896>}]} {
    %c0 = arith.constant 0 : index
    %c0_0 = arith.constant 0 : index
    %0 = vector.load %arg1[%c0, %c0_0] : memref<8x384xf32, #tpu.memory_space<vmem>>, vector<8x128xf32>
    %c0_1 = arith.constant 0 : index
    %c0_2 = arith.constant 0 : index
    %1 = vector.load %arg2[%c0_1, %c0_2] : memref<128x128xf32, #tpu.memory_space<vmem>>, vector<128x128xf32>
    %cst = arith.constant dense<0.000000e+00> : vector<8x128xf32>
    %2 = tpu.matmul %0, %1, %cst {dimension_numbers = #tpu.dot_dimension_numbers<[1], [0], [0], [1], [0, 0, 1, 1], [], []>} : vector<8x128xf32>, vector<128x128xf32>, vector<8x128xf32> -> vector<8x128xf32>
    %c0_3 = arith.constant 0 : index
    %c0_4 = arith.constant 0 : index
    %3 = vector.load %arg5[%c0_3, %c0_4] : memref<8x256xf32, #tpu.memory_space<vmem>>, vector<1x128xf32>
    %4 = vector.broadcast %3 : vector<1x128xf32> to vector<8x128xf32>
    %5 = arith.addf %2, %4 : vector<8x128xf32>
    %cst_5 = arith.constant 0.000000e+00 : f32
    %6 = vector.broadcast %cst_5 : f32 to vector<8x128xf32>
    %7 = arith.maximumf %5, %6 : vector<8x128xf32>
    %c0_6 = arith.constant 0 : index
    %c0_7 = arith.constant 0 : index
    %c0_8 = arith.constant 0 : index
    %8 = vector.load %arg3[%c0_6, %c0_7, %c0_8] : memref<2x128x256xf32, #tpu.memory_space<vmem>>, vector<1x128x256xf32>
    %9 = vector.shape_cast %8 : vector<1x128x256xf32> to vector<128x256xf32>
    %cst_9 = arith.constant dense<0.000000e+00> : vector<8x256xf32>
    %10 = tpu.matmul %7, %9, %cst_9 {dimension_numbers = #tpu.dot_dimension_numbers<[1], [0], [0], [1], [0, 0, 1, 1], [], []>} : vector<8x128xf32>, vector<128x256xf32>, vector<8x256xf32> -> vector<8x256xf32>
    %c2 = arith.constant 2 : index
    %c0_10 = arith.constant 0 : index
    %11 = vector.load %arg5[%c2, %c0_10] : memref<8x256xf32, #tpu.memory_space<vmem>>, vector<1x256xf32>
    %12 = vector.broadcast %11 : vector<1x256xf32> to vector<8x256xf32>
    %13 = arith.addf %10, %12 : vector<8x256xf32>
    %14 = vector.extract_strided_slice %13 {offsets = [0, 0], sizes = [8, 128], strides = [1, 1]} : vector<8x256xf32> to vector<8x128xf32>
    %15 = vector.extract_strided_slice %13 {offsets = [0, 128], sizes = [8, 128], strides = [1, 1]} : vector<8x256xf32> to vector<8x128xf32>
    %c0_11 = arith.constant 0 : index
    %c128 = arith.constant 128 : index
    %16 = vector.load %arg1[%c0_11, %c128] : memref<8x384xf32, #tpu.memory_space<vmem>>, vector<8x128xf32>
    %cst_12 = arith.constant 5.000000e-01 : f32
    %17 = vector.broadcast %cst_12 : f32 to vector<8x128xf32>
    %18 = arith.mulf %17, %15 : vector<8x128xf32>
    %19 = math.exp %18 : vector<8x128xf32>
    %20 = arith.mulf %16, %19 : vector<8x128xf32>
    %21 = arith.addf %14, %20 : vector<8x128xf32>
    %c0_13 = arith.constant 0 : index
    %c128_14 = arith.constant 128 : index
    %22 = vector.load %arg8[%c0_13, %c128_14] : memref<8x896xf32, #tpu.memory_space<vmem>>, vector<8x128xf32>
    tpu.vector_store %arg8[%c0_13, %c128_14], %14 {strides = array<i32>} : memref<8x896xf32, #tpu.memory_space<vmem>>, vector<8x128xf32>,
    %c0_15 = arith.constant 0 : index
    %c384 = arith.constant 384 : index
    %23 = vector.load %arg8[%c0_15, %c384] : memref<8x896xf32, #tpu.memory_space<vmem>>, vector<8x128xf32>
    tpu.vector_store %arg8[%c0_15, %c384], %15 {strides = array<i32>} : memref<8x896xf32, #tpu.memory_space<vmem>>, vector<8x128xf32>,
    %c0_16 = arith.constant 0 : index
    %c640 = arith.constant 640 : index
    %24 = vector.load %arg8[%c0_16, %c640] : memref<8x896xf32, #tpu.memory_space<vmem>>, vector<8x128xf32>
    tpu.vector_store %arg8[%c0_16, %c640], %21 {strides = array<i32>} : memref<8x896xf32, #tpu.memory_space<vmem>>, vector<8x128xf32>,
    %c0_17 = arith.constant 0 : index
    %c0_18 = arith.constant 0 : index
    %c0_19 = arith.constant 0 : index
    %25 = vector.load %arg6[%c0_17, %c0_18, %c0_19] : memref<2x128x128xf32, #tpu.memory_space<vmem>>, vector<1x128x128xf32>
    %26 = vector.shape_cast %25 : vector<1x128x128xf32> to vector<128x128xf32>
    %cst_20 = arith.constant dense<0.000000e+00> : vector<8x128xf32>
    %27 = tpu.matmul %14, %26, %cst_20 {dimension_numbers = #tpu.dot_dimension_numbers<[1], [0], [0], [1], [0, 0, 1, 1], [], []>} : vector<8x128xf32>, vector<128x128xf32>, vector<8x128xf32> -> vector<8x128xf32>
    %c1 = arith.constant 1 : index
    %c0_21 = arith.constant 0 : index
    %28 = vector.load %arg5[%c1, %c0_21] : memref<8x256xf32, #tpu.memory_space<vmem>>, vector<1x128xf32>
    %29 = vector.broadcast %28 : vector<1x128xf32> to vector<8x128xf32>
    %30 = arith.addf %27, %29 : vector<8x128xf32>
    %cst_22 = arith.constant 0.000000e+00 : f32
    %31 = vector.broadcast %cst_22 : f32 to vector<8x128xf32>
    %32 = arith.maximumf %30, %31 : vector<8x128xf32>
    %c1_23 = arith.constant 1 : index
    %c0_24 = arith.constant 0 : index
    %c0_25 = arith.constant 0 : index
    %33 = vector.load %arg3[%c1_23, %c0_24, %c0_25] : memref<2x128x256xf32, #tpu.memory_space<vmem>>, vector<1x128x256xf32>
    %34 = vector.shape_cast %33 : vector<1x128x256xf32> to vector<128x256xf32>
    %cst_26 = arith.constant dense<0.000000e+00> : vector<8x256xf32>
    %35 = tpu.matmul %32, %34, %cst_26 {dimension_numbers = #tpu.dot_dimension_numbers<[1], [0], [0], [1], [0, 0, 1, 1], [], []>} : vector<8x128xf32>, vector<128x256xf32>, vector<8x256xf32> -> vector<8x256xf32>
    %c3 = arith.constant 3 : index
    %c0_27 = arith.constant 0 : index
    %36 = vector.load %arg5[%c3, %c0_27] : memref<8x256xf32, #tpu.memory_space<vmem>>, vector<1x256xf32>
    %37 = vector.broadcast %36 : vector<1x256xf32> to vector<8x256xf32>
    %38 = arith.addf %35, %37 : vector<8x256xf32>
    %39 = vector.extract_strided_slice %38 {offsets = [0, 0], sizes = [8, 128], strides = [1, 1]} : vector<8x256xf32> to vector<8x128xf32>
    %40 = vector.extract_strided_slice %38 {offsets = [0, 128], sizes = [8, 128], strides = [1, 1]} : vector<8x256xf32> to vector<8x128xf32>
    %c0_28 = arith.constant 0 : index
    %c256 = arith.constant 256 : index
    %41 = vector.load %arg1[%c0_28, %c256] : memref<8x384xf32, #tpu.memory_space<vmem>>, vector<8x128xf32>
    %cst_29 = arith.constant 5.000000e-01 : f32
    %42 = vector.broadcast %cst_29 : f32 to vector<8x128xf32>
    %43 = arith.mulf %42, %40 : vector<8x128xf32>
    %44 = math.exp %43 : vector<8x128xf32>
    %45 = arith.mulf %41, %44 : vector<8x128xf32>
    %46 = arith.addf %39, %45 : vector<8x128xf32>
    %c0_30 = arith.constant 0 : index
    %c256_31 = arith.constant 256 : index
    %47 = vector.load %arg8[%c0_30, %c256_31] : memref<8x896xf32, #tpu.memory_space<vmem>>, vector<8x128xf32>
    tpu.vector_store %arg8[%c0_30, %c256_31], %39 {strides = array<i32>} : memref<8x896xf32, #tpu.memory_space<vmem>>, vector<8x128xf32>,
    %c0_32 = arith.constant 0 : index
    %c512 = arith.constant 512 : index
    %48 = vector.load %arg8[%c0_32, %c512] : memref<8x896xf32, #tpu.memory_space<vmem>>, vector<8x128xf32>
    tpu.vector_store %arg8[%c0_32, %c512], %40 {strides = array<i32>} : memref<8x896xf32, #tpu.memory_space<vmem>>, vector<8x128xf32>,
    %c0_33 = arith.constant 0 : index
    %c768 = arith.constant 768 : index
    %49 = vector.load %arg8[%c0_33, %c768] : memref<8x896xf32, #tpu.memory_space<vmem>>, vector<8x128xf32>
    tpu.vector_store %arg8[%c0_33, %c768], %46 {strides = array<i32>} : memref<8x896xf32, #tpu.memory_space<vmem>>, vector<8x128xf32>,
    %c1_34 = arith.constant 1 : index
    %c0_35 = arith.constant 0 : index
    %c0_36 = arith.constant 0 : index
    %50 = vector.load %arg6[%c1_34, %c0_35, %c0_36] : memref<2x128x128xf32, #tpu.memory_space<vmem>>, vector<1x128x128xf32>
    %51 = vector.shape_cast %50 : vector<1x128x128xf32> to vector<128x128xf32>
    %cst_37 = arith.constant dense<0.000000e+00> : vector<8x128xf32>
    %52 = tpu.matmul %21, %51, %cst_37 {dimension_numbers = #tpu.dot_dimension_numbers<[1], [0], [0], [1], [0, 0, 1, 1], [], []>} : vector<8x128xf32>, vector<128x128xf32>, vector<8x128xf32> -> vector<8x128xf32>
    %c4 = arith.constant 4 : index
    %c0_38 = arith.constant 0 : index
    %53 = vector.load %arg5[%c4, %c0_38] : memref<8x256xf32, #tpu.memory_space<vmem>>, vector<1x128xf32>
    %54 = vector.broadcast %53 : vector<1x128xf32> to vector<8x128xf32>
    %55 = arith.addf %52, %54 : vector<8x128xf32>
    %cst_39 = arith.constant 0.000000e+00 : f32
    %56 = vector.broadcast %cst_39 : f32 to vector<8x128xf32>
    %57 = arith.maximumf %55, %56 : vector<8x128xf32>
    %c0_40 = arith.constant 0 : index
    %c0_41 = arith.constant 0 : index
    %c0_42 = arith.constant 0 : index
    %58 = vector.load %arg7[%c0_40, %c0_41, %c0_42] : memref<1x128x128xf32, #tpu.memory_space<vmem>>, vector<1x128x128xf32>
    %59 = vector.shape_cast %58 : vector<1x128x128xf32> to vector<128x128xf32>
    %cst_43 = arith.constant dense<0.000000e+00> : vector<8x128xf32>
    %60 = tpu.matmul %57, %59, %cst_43 {dimension_numbers = #tpu.dot_dimension_numbers<[1], [0], [0], [1], [0, 0, 1, 1], [], []>} : vector<8x128xf32>, vector<128x128xf32>, vector<8x128xf32> -> vector<8x128xf32>
    %c5 = arith.constant 5 : index
    %c0_44 = arith.constant 0 : index
    %61 = vector.load %arg5[%c5, %c0_44] : memref<8x256xf32, #tpu.memory_space<vmem>>, vector<1x128xf32>
    %62 = vector.broadcast %61 : vector<1x128xf32> to vector<8x128xf32>
    %63 = arith.addf %60, %62 : vector<8x128xf32>
    %64 = arith.addf %39, %63 : vector<8x128xf32>
    %cst_45 = arith.constant 5.000000e-01 : f32
    %65 = vector.broadcast %cst_45 : f32 to vector<8x128xf32>
    %66 = arith.mulf %64, %65 : vector<8x128xf32>
    %c0_46 = arith.constant 0 : index
    %c0_47 = arith.constant 0 : index
    %67 = vector.load %arg4[%c0_46, %c0_47] : memref<128x128xf32, #tpu.memory_space<vmem>>, vector<128x128xf32>
    %cst_48 = arith.constant dense<0.000000e+00> : vector<8x128xf32>
    %68 = tpu.matmul %66, %67, %cst_48 {dimension_numbers = #tpu.dot_dimension_numbers<[1], [0], [0], [1], [0, 0, 1, 1], [], []>} : vector<8x128xf32>, vector<128x128xf32>, vector<8x128xf32> -> vector<8x128xf32>
    %c6 = arith.constant 6 : index
    %c0_49 = arith.constant 0 : index
    %69 = vector.load %arg5[%c6, %c0_49] : memref<8x256xf32, #tpu.memory_space<vmem>>, vector<1x128xf32>
    %70 = vector.broadcast %69 : vector<1x128xf32> to vector<8x128xf32>
    %71 = arith.addf %68, %70 : vector<8x128xf32>
    %c0_50 = arith.constant 0 : index
    %c0_51 = arith.constant 0 : index
    %72 = vector.load %arg8[%c0_50, %c0_51] : memref<8x896xf32, #tpu.memory_space<vmem>>, vector<8x128xf32>
    tpu.vector_store %arg8[%c0_50, %c0_51], %71 {strides = array<i32>} : memref<8x896xf32, #tpu.memory_space<vmem>>, vector<8x128xf32>,
    return
  }
  func.func @transform_0(%arg0: i32) -> (i32, i32) {
    %c0_i32 = arith.constant 0 : i32
    %c0_i32_0 = arith.constant 0 : i32
    return %arg0, %c0_i32 : i32, i32
  }
  func.func @transform_1(%arg0: i32) -> (i32, i32) {
    %c0_i32 = arith.constant 0 : i32
    %c0_i32_0 = arith.constant 0 : i32
    %c0_i32_1 = arith.constant 0 : i32
    return %c0_i32, %c0_i32_0 : i32, i32
  }
  func.func @transform_2(%arg0: i32) -> (i32, i32, i32) {
    %c0_i32 = arith.constant 0 : i32
    %c0_i32_0 = arith.constant 0 : i32
    %c0_i32_1 = arith.constant 0 : i32
    %c0_i32_2 = arith.constant 0 : i32
    return %c0_i32, %c0_i32_0, %c0_i32_1 : i32, i32, i32
  }
  func.func @transform_3(%arg0: i32) -> (i32, i32) {
    %c0_i32 = arith.constant 0 : i32
    %c0_i32_0 = arith.constant 0 : i32
    %c0_i32_1 = arith.constant 0 : i32
    return %c0_i32, %c0_i32_0 : i32, i32
  }
  func.func @transform_4(%arg0: i32) -> (i32, i32) {
    %c0_i32 = arith.constant 0 : i32
    %c0_i32_0 = arith.constant 0 : i32
    %c0_i32_1 = arith.constant 0 : i32
    return %c0_i32, %c0_i32_0 : i32, i32
  }
  func.func @transform_5(%arg0: i32) -> (i32, i32, i32) {
    %c0_i32 = arith.constant 0 : i32
    %c0_i32_0 = arith.constant 0 : i32
    %c0_i32_1 = arith.constant 0 : i32
    %c0_i32_2 = arith.constant 0 : i32
    return %c0_i32, %c0_i32_0, %c0_i32_1 : i32, i32, i32
  }
  func.func @transform_6(%arg0: i32) -> (i32, i32, i32) {
    %c0_i32 = arith.constant 0 : i32
    %c0_i32_0 = arith.constant 0 : i32
    %c0_i32_1 = arith.constant 0 : i32
    %c0_i32_2 = arith.constant 0 : i32
    return %c0_i32, %c0_i32_0, %c0_i32_1 : i32, i32, i32
  }
  func.func @transform_7(%arg0: i32) -> (i32, i32) {
    %c0_i32 = arith.constant 0 : i32
    %c0_i32_0 = arith.constant 0 : i32
    return %arg0, %c0_i32 : i32, i32
  }
}

</mosaic_0001>

<llo_original>
// kernel: tpu_custom_call.1
$region0: #{tpu_custom_call.1}
  #allocation0 [shape = 'u32[]', space=smem, size = 0x4, offset = 0x4, fixed_abs, tag = 'smem constant byte address 0x4 - core index']
  #allocation1 [shape = 'u32[144,128]{1,0:T(1,128)}', space=vmem, size = 0x12000, scoped, tag = 'internal scratch']
  %s0 = inlined_call_operand.hbm [shape: f32[16,384], index: 0, kind: input, shape index: {}]
  %s1 = inlined_call_operand.hbm [shape: f32[128,128], index: 1, kind: input, shape index: {}]
  %s2 = inlined_call_operand.hbm [shape: f32[2,128,256], index: 2, kind: input, shape index: {}]
  %s3 = inlined_call_operand.hbm [shape: f32[128,128], index: 3, kind: input, shape index: {}]
  %s4 = inlined_call_operand.hbm [shape: f32[8,256], index: 4, kind: input, shape index: {}]
  %s5 = inlined_call_operand.hbm [shape: f32[2,128,128], index: 5, kind: input, shape index: {}]
  %s6 = inlined_call_operand.hbm [shape: f32[1,128,128], index: 6, kind: input, shape index: {}]
  %s7 = inlined_call_operand.hbm [shape: f32[16,896], index: 7, kind: output, shape index: {}]
  %s8 = sld [smem:[#allocation0]]
  $region89: #{tpu_custom_call.1} parent=0
    _
  %s10 = ssub.s32 1, %s8
  %s11 = scalar_select 0, %s10, %s8
  $region1: #{tpu_custom_call.1} parent=0
    #allocation2 [shape = 'u8[24576]{0}', space=vmem, size = 0x6000, scoped, tag = 'input window, operand 0']
    #allocation3 [shape = 's32[2]{0}', space=sflag, size = 0x8, scoped, tag = 'scoped memory for tpu_custom_call.1']
    #allocation4 [shape = 's32[2]{0}', space=sflag, size = 0x8, scoped, tag = 'scoped memory for tpu_custom_call.1']
    #allocation5 [shape = 'u8[65536]{0}', space=vmem, size = 0x10000, scoped, tag = 'input window, operand 1, single buffered']
    #allocation6 [shape = 's32[1]{0}', space=sflag, size = 0x4, scoped, tag = 'scoped memory for tpu_custom_call.1']
    #allocation7 [shape = 'u8[262144]{0}', space=vmem, size = 0x40000, scoped, tag = 'input window, operand 2, single buffered']
    #allocation8 [shape = 'u8[65536]{0}', space=vmem, size = 0x10000, scoped, tag = 'input window, operand 3, single buffered']
    #allocation9 [shape = 's32[1]{0}', space=sflag, size = 0x4, scoped, tag = 'scoped memory for tpu_custom_call.1']
    #allocation10 [shape = 'u8[8192]{0}', space=vmem, size = 0x2000, scoped, tag = 'input window, operand 4, single buffered']
    #allocation11 [shape = 'u8[131072]{0}', space=vmem, size = 0x20000, scoped, tag = 'input window, operand 5, single buffered']
    #allocation12 [shape = 's32[1]{0}', space=sflag, size = 0x4, scoped, tag = 'scoped memory for tpu_custom_call.1']
    #allocation13 [shape = 'u8[65536]{0}', space=vmem, size = 0x10000, scoped, tag = 'input window, operand 6, single buffered']
    #allocation14 [shape = 'u8[57344]{0}', space=vmem, size = 0xe000, scoped, tag = 'output window, operand 0']
    %12 = vsyncpa [#allocation3], 0
    %s13 = scalar_lea.sflag [#allocation3], 1
    %14 = vsyncpa %s13, 0
    %15 = vsyncpa [#allocation6], 0
    %16 = vsyncpa [#allocation9], 0
    %17 = vsyncpa [#allocation12], 0
    %18 = vsyncpa [#allocation4], 0
    %s19 = scalar_lea.sflag [#allocation4], 1
    %20 = vsyncpa %s19, 0
    loop: start=0, step=1, limit=4
    $region2: #{tpu_custom_call.1} parent=1 // loop_pre_header
      _
    $region3: #{tpu_custom_call.1} parent=1 // loop_header
      %s22 = sphi 0, %s26
      %p23 = scmp.ge.s32.totalorder %s22, 4
      %s32 = sphi 0, %s34
      %s35 = sphi 0, %s32
      %s36 = sphi 0, %s35
      %s52 = sphi 0, %s36
      %s56 = sphi 0, %s56
      %s58 = sphi 0, %s56
      %s59 = sphi 0, %s58
      %s73 = sphi 0, %s59
      %s77 = sphi 0, %s77
      %s79 = sphi 0, %s77
      %s80 = sphi 0, %s79
      %s94 = sphi 0, %s80
      %s98 = sphi 0, %s98
      %s100 = sphi 0, %s98
      %s101 = sphi 0, %s100
      %s115 = sphi 0, %s101
      %s119 = sphi 0, %s119
      %s121 = sphi 0, %s119
      %s122 = sphi 0, %s121
      %s136 = sphi 0, %s122
      %s140 = sphi 0, %s140
      %s142 = sphi 0, %s140
      %s143 = sphi 0, %s142
      %s157 = sphi 0, %s143
      %s161 = sphi 0, %s161
      %s163 = sphi 0, %s161
      %s164 = sphi 0, %s163
      %s178 = sphi 0, %s164
      %s184 = sphi 0, %s186
      %s187 = sphi 0, %s184
      %s188 = sphi 0, %s187
      %s204 = sphi 0, %s188
    $region4: #{tpu_custom_call.1} parent=1 // loop_header_branch
      %25 = sbr.rel (%p23) target = $region8
    $region5: #{tpu_custom_call.1} parent=1 // loop_body
      %s27 = ssub.s32 %s22, 1
      %s28 = ssub.s32 %s22, 2
      %s29 = sadd.s32 %s22, 1
      %s30 = ssub.s32 %s22, %s29
      %p31 = scmp.eq.s32.totalorder %s30, 0
      %s33 = sadd.s32 %s32, 1
      %s34 = scalar_select %p31, %s32, %s33
      %p37 = pneg %p31
      %p38 = scmp.eq.s32.totalorder %s22, 1
      %p39 = por %p37, %p38
      %p40 = scmp.ne.s32.totalorder %s32, %s35
      %p41 = scmp.eq.s32.totalorder %s22, 0
      %p42 = por %p40, %p41
      %p43 = scmp.ne.s32.totalorder %s32, %s35
      %p44 = scmp.eq.s32.totalorder %s27, 1
      %p45 = por %p43, %p44
      %p46 = scmp.ne.s32.totalorder %s35, %s36
      %p47 = scmp.eq.s32.totalorder %s27, 0
      %p48 = por %p46, %p47
      %p49 = scmp.ne.s32.totalorder %s35, %s36
      %p50 = scmp.eq.s32.totalorder %s28, 1
      %p51 = por %p49, %p50
      %p53 = scmp.ne.s32.totalorder %s36, %s52
      %p54 = scmp.eq.s32.totalorder %s28, 0
      %p55 = por %p53, %p54
      %s57 = sadd.s32 %s56, 1
      %p60 = scmp.eq.s32.totalorder %s22, 1
      %p61 = scmp.ne.s32.totalorder %s56, %s58
      %p62 = scmp.eq.s32.totalorder %s22, 0
      %p63 = por %p61, %p62
      %p64 = scmp.ne.s32.totalorder %s56, %s58
      %p65 = scmp.eq.s32.totalorder %s27, 1
      %p66 = por %p64, %p65
      %p67 = scmp.ne.s32.totalorder %s58, %s59
      %p68 = scmp.eq.s32.totalorder %s27, 0
      %p69 = por %p67, %p68
      %p70 = scmp.ne.s32.totalorder %s58, %s59
      %p71 = scmp.eq.s32.totalorder %s28, 1
      %p72 = por %p70, %p71
      %p74 = scmp.ne.s32.totalorder %s59, %s73
      %p75 = scmp.eq.s32.totalorder %s28, 0
      %p76 = por %p74, %p75
      %s78 = sadd.s32 %s77, 1
      %p81 = scmp.eq.s32.totalorder %s22, 1
      %p82 = scmp.ne.s32.totalorder %s77, %s79
      %p83 = scmp.eq.s32.totalorder %s22, 0
      %p84 = por %p82, %p83
      %p85 = scmp.ne.s32.totalorder %s77, %s79
      %p86 = scmp.eq.s32.totalorder %s27, 1
      %p87 = por %p85, %p86
      %p88 = scmp.ne.s32.totalorder %s79, %s80
      %p89 = scmp.eq.s32.totalorder %s27, 0
      %p90 = por %p88, %p89
      %p91 = scmp.ne.s32.totalorder %s79, %s80
      %p92 = scmp.eq.s32.totalorder %s28, 1
      %p93 = por %p91, %p92
      %p95 = scmp.ne.s32.totalorder %s80, %s94
      %p96 = scmp.eq.s32.totalorder %s28, 0
      %p97 = por %p95, %p96
      %s99 = sadd.s32 %s98, 1
      %p102 = scmp.eq.s32.totalorder %s22, 1
      %p103 = scmp.ne.s32.totalorder %s98, %s100
      %p104 = scmp.eq.s32.totalorder %s22, 0
      %p105 = por %p103, %p104
      %p106 = scmp.ne.s32.totalorder %s98, %s100
      %p107 = scmp.eq.s32.totalorder %s27, 1
      %p108 = por %p106, %p107
      %p109 = scmp.ne.s32.totalorder %s100, %s101
      %p110 = scmp.eq.s32.totalorder %s27, 0
      %p111 = por %p109, %p110
      %p112 = scmp.ne.s32.totalorder %s100, %s101
      %p113 = scmp.eq.s32.totalorder %s28, 1
      %p114 = por %p112, %p113
      %p116 = scmp.ne.s32.totalorder %s101, %s115
      %p117 = scmp.eq.s32.totalorder %s28, 0
      %p118 = por %p116, %p117
      %s120 = sadd.s32 %s119, 1
      %p123 = scmp.eq.s32.totalorder %s22, 1
      %p124 = scmp.ne.s32.totalorder %s119, %s121
      %p125 = scmp.eq.s32.totalorder %s22, 0
      %p126 = por %p124, %p125
      %p127 = scmp.ne.s32.totalorder %s119, %s121
      %p128 = scmp.eq.s32.totalorder %s27, 1
      %p129 = por %p127, %p128
      %p130 = scmp.ne.s32.totalorder %s121, %s122
      %p131 = scmp.eq.s32.totalorder %s27, 0
      %p132 = por %p130, %p131
      %p133 = scmp.ne.s32.totalorder %s121, %s122
      %p134 = scmp.eq.s32.totalorder %s28, 1
      %p135 = por %p133, %p134
      %p137 = scmp.ne.s32.totalorder %s122, %s136
      %p138 = scmp.eq.s32.totalorder %s28, 0
      %p139 = por %p137, %p138
      %s141 = sadd.s32 %s140, 1
      %p144 = scmp.eq.s32.totalorder %s22, 1
      %p145 = scmp.ne.s32.totalorder %s140, %s142
      %p146 = scmp.eq.s32.totalorder %s22, 0
      %p147 = por %p145, %p146
      %p148 = scmp.ne.s32.totalorder %s140, %s142
      %p149 = scmp.eq.s32.totalorder %s27, 1
      %p150 = por %p148, %p149
      %p151 = scmp.ne.s32.totalorder %s142, %s143
      %p152 = scmp.eq.s32.totalorder %s27, 0
      %p153 = por %p151, %p152
      %p154 = scmp.ne.s32.totalorder %s142, %s143
      %p155 = scmp.eq.s32.totalorder %s28, 1
      %p156 = por %p154, %p155
      %p158 = scmp.ne.s32.totalorder %s143, %s157
      %p159 = scmp.eq.s32.totalorder %s28, 0
      %p160 = por %p158, %p159
      %s162 = sadd.s32 %s161, 1
      %p165 = scmp.eq.s32.totalorder %s22, 1
      %p166 = scmp.ne.s32.totalorder %s161, %s163
      %p167 = scmp.eq.s32.totalorder %s22, 0
      %p168 = por %p166, %p167
      %p169 = scmp.ne.s32.totalorder %s161, %s163
      %p170 = scmp.eq.s32.totalorder %s27, 1
      %p171 = por %p169, %p170
      %p172 = scmp.ne.s32.totalorder %s163, %s164
      %p173 = scmp.eq.s32.totalorder %s27, 0
      %p174 = por %p172, %p173
      %p175 = scmp.ne.s32.totalorder %s163, %s164
      %p176 = scmp.eq.s32.totalorder %s28, 1
      %p177 = por %p175, %p176
      %p179 = scmp.ne.s32.totalorder %s164, %s178
      %p180 = scmp.eq.s32.totalorder %s28, 0
      %p181 = por %p179, %p180
      %s182 = ssub.s32 %s22, %s29
      %p183 = scmp.eq.s32.totalorder %s182, 0
      %s185 = sadd.s32 %s184, 1
      %s186 = scalar_select %p183, %s184, %s185
      %p189 = pneg %p183
      %p190 = scmp.eq.s32.totalorder %s22, 1
      %p191 = por %p189, %p190
      %p192 = scmp.ne.s32.totalorder %s184, %s187
      %p193 = scmp.eq.s32.totalorder %s22, 0
      %p194 = por %p192, %p193
      %p195 = scmp.ne.s32.totalorder %s184, %s187
      %p196 = scmp.eq.s32.totalorder %s27, 1
      %p197 = por %p195, %p196
      %p198 = scmp.ne.s32.totalorder %s187, %s188
      %p199 = scmp.eq.s32.totalorder %s27, 0
      %p200 = por %p198, %p199
      %p201 = scmp.ne.s32.totalorder %s187, %s188
      %p202 = scmp.eq.s32.totalorder %s28, 1
      %p203 = por %p201, %p202
      %p205 = scmp.ne.s32.totalorder %s188, %s204
      %p206 = scmp.eq.s32.totalorder %s28, 0
      %p207 = por %p205, %p206
      %p208 = scmp.le.s32.totalorder 1, %s22
      %p209 = scmp.lt.s32.totalorder %s22, 3
      %p210 = pnand %p208, %p209
      %p211 = pneg %p210
      // Predicated region
      $region9: #{tpu_custom_call.1} parent=5 // pred_check
        _
      $region10: #{tpu_custom_call.1} parent=5 // pred_check_branch
        %213 = sbr.rel (%p210) target = $region12
      $region11: #{tpu_custom_call.1} parent=5 // pred_region
        %s214 = ssub.s32 %s22, 1
        // Predicated region
        $region13: #{tpu_custom_call.1} parent=11 // pred_check
          %p215 = pneg %p69
        $region14: #{tpu_custom_call.1} parent=11 // pred_check_branch
          %217 = sbr.rel (%p215) target = $region16
        $region15: #{tpu_custom_call.1} parent=11 // pred_region
          %s219 = ssub.s32 2048, 2048
          %220 = vsyncadd [#allocation6], %s219
          %s221 = sshll.u32 [#allocation5], 4
          %s222 = int_to_ptr.vmem [resolvable:$true] %s221
          %227 = dma.hbm_to_vmem [thread:$0]  %s1, 2048, %s222, [#allocation6], 128, 128, 8
        $region16: #{tpu_custom_call.1} parent=11 // pred_fallthru
          _
        // Predicated region
        $region17: #{tpu_custom_call.1} parent=11 // pred_check
          %p228 = pneg %p90
        $region18: #{tpu_custom_call.1} parent=11 // pred_check_branch
          %230 = sbr.rel (%p228) target = $region20
        $region19: #{tpu_custom_call.1} parent=11 // pred_region
          %s232 = ssub.s32 8192, 8192
          %233 = vsyncadd [#allocation6], %s232
          %s234 = sshll.u32 [#allocation7], 4
          %s235 = int_to_ptr.vmem [resolvable:$true] %s234
          %240 = dma.hbm_to_vmem [thread:$0]  %s2, 8192, %s235, [#allocation6], 256, 256, 16
        $region20: #{tpu_custom_call.1} parent=11 // pred_fallthru
          _
        // Predicated region
        $region21: #{tpu_custom_call.1} parent=11 // pred_check
          %p241 = pneg %p111
        $region22: #{tpu_custom_call.1} parent=11 // pred_check_branch
          %243 = sbr.rel (%p241) target = $region24
        $region23: #{tpu_custom_call.1} parent=11 // pred_region
          %s245 = ssub.s32 2048, 2048
          %246 = vsyncadd [#allocation9], %s245
          %s247 = sshll.u32 [#allocation8], 4
          %s248 = int_to_ptr.vmem [resolvable:$true] %s247
          %253 = dma.hbm_to_vmem [thread:$0]  %s3, 2048, %s248, [#allocation9], 128, 128, 8
        $region24: #{tpu_custom_call.1} parent=11 // pred_fallthru
          _
        // Predicated region
        $region25: #{tpu_custom_call.1} parent=11 // pred_check
          %p254 = pneg %p132
        $region26: #{tpu_custom_call.1} parent=11 // pred_check_branch
          %256 = sbr.rel (%p254) target = $region28
        $region27: #{tpu_custom_call.1} parent=11 // pred_region
          %s258 = ssub.s32 256, 256
          %259 = vsyncadd [#allocation9], %s258
          %s261 = sshll.u32 [#allocation10], 4
          %s262 = int_to_ptr.vmem [resolvable:$true] %s261
          %264 = dma.hbm_to_vmem [thread:$0]  %s4, 256, %s262, [#allocation9]
        $region28: #{tpu_custom_call.1} parent=11 // pred_fallthru
          _
        // Predicated region
        $region29: #{tpu_custom_call.1} parent=11 // pred_check
          %p265 = pneg %p153
        $region30: #{tpu_custom_call.1} parent=11 // pred_check_branch
          %267 = sbr.rel (%p265) target = $region32
        $region31: #{tpu_custom_call.1} parent=11 // pred_region
          %s269 = ssub.s32 4096, 4096
          %270 = vsyncadd [#allocation12], %s269
          %s271 = sshll.u32 [#allocation11], 4
          %s272 = int_to_ptr.vmem [resolvable:$true] %s271
          %277 = dma.hbm_to_vmem [thread:$0]  %s5, 4096, %s272, [#allocation12], 128, 128, 8
        $region32: #{tpu_custom_call.1} parent=11 // pred_fallthru
          _
        // Predicated region
        $region33: #{tpu_custom_call.1} parent=11 // pred_check
          %p278 = pneg %p174
        $region34: #{tpu_custom_call.1} parent=11 // pred_check_branch
          %280 = sbr.rel (%p278) target = $region36
        $region35: #{tpu_custom_call.1} parent=11 // pred_region
          %s282 = ssub.s32 2048, 2048
          %283 = vsyncadd [#allocation12], %s282
          %s284 = sshll.u32 [#allocation13], 4
          %s285 = int_to_ptr.vmem [resolvable:$true] %s284
          %290 = dma.hbm_to_vmem [thread:$0]  %s6, 2048, %s285, [#allocation12], 128, 128, 8
        $region36: #{tpu_custom_call.1} parent=11 // pred_fallthru
          _
      $region12: #{tpu_custom_call.1} parent=5 // pred_fallthru
        _
      %p291 = scmp.lt.s32.totalorder %s22, 2
      // Predicated region
      $region37: #{tpu_custom_call.1} parent=5 // pred_check
        %p292 = pneg %p291
      $region38: #{tpu_custom_call.1} parent=5 // pred_check_branch
        %294 = sbr.rel (%p292) target = $region40
      $region39: #{tpu_custom_call.1} parent=5 // pred_region
        // Predicated region
        $region41: #{tpu_custom_call.1} parent=39 // pred_check
          %p295 = pneg %p42
        $region42: #{tpu_custom_call.1} parent=39 // pred_check_branch
          %297 = sbr.rel (%p295) target = $region44
        $region43: #{tpu_custom_call.1} parent=39 // pred_region
          %s298 = sand.u32 %s32, 1
          %s299 = scalar_lea.sflag [#allocation3], %s298
          %s300 = sand.u32 %s32, 1
          %s301 = smul.addr %s300, 24
          %s302 = scalar_lea.vmem [#allocation2], %s301
          %s304 = ssub.s32 384, 384
          %305 = vsyncadd %s299, %s304
          %s306 = smul.addr %s22, 3
          %s307 = smul.addr %s306, 128
          %s308 = scalar_lea.hbm %s0, %s307
          %s310 = sshll.u32 %s302, 4
          %s311 = int_to_ptr.vmem [resolvable:$true] %s310
          %313 = dma.hbm_to_vmem [thread:$0]  %s308, 384, %s311, %s299
        $region44: #{tpu_custom_call.1} parent=39 // pred_fallthru
          _
      $region40: #{tpu_custom_call.1} parent=5 // pred_fallthru
        _
      %p314 = scmp.le.s32.totalorder 1, %s22
      %p315 = scmp.lt.s32.totalorder %s22, 3
      %p316 = pnand %p314, %p315
      %p317 = pneg %p316
      // Predicated region
      $region45: #{tpu_custom_call.1} parent=5 // pred_check
        _
      $region46: #{tpu_custom_call.1} parent=5 // pred_check_branch
        %319 = sbr.rel (%p316) target = $region48
      $region47: #{tpu_custom_call.1} parent=5 // pred_region
        %s320 = ssub.s32 %s22, 1
        %s321 = sand.u32 %s35, 1
        %s322 = scalar_lea.sflag [#allocation3], %s321
        %s323 = sand.u32 %s35, 1
        %s324 = smul.addr %s323, 24
        %s325 = scalar_lea.vmem [#allocation2], %s324
        // Predicated region
        $region49: #{tpu_custom_call.1} parent=47 // pred_check
          %p326 = pneg %p48
        $region50: #{tpu_custom_call.1} parent=47 // pred_check_branch
          %328 = sbr.rel (%p326) target = $region52
        $region51: #{tpu_custom_call.1} parent=47 // pred_region
          %329 = dma.done %s322, 384
        $region52: #{tpu_custom_call.1} parent=47 // pred_fallthru
          _
        // Predicated region
        $region53: #{tpu_custom_call.1} parent=47 // pred_check
          %p330 = pneg %p69
        $region54: #{tpu_custom_call.1} parent=47 // pred_check_branch
          %332 = sbr.rel (%p330) target = $region56
        $region55: #{tpu_custom_call.1} parent=47 // pred_region
          %333 = dma.done [#allocation6], 2048
        $region56: #{tpu_custom_call.1} parent=47 // pred_fallthru
          _
        // Predicated region
        $region57: #{tpu_custom_call.1} parent=47 // pred_check
          %p334 = pneg %p90
        $region58: #{tpu_custom_call.1} parent=47 // pred_check_branch
          %336 = sbr.rel (%p334) target = $region60
        $region59: #{tpu_custom_call.1} parent=47 // pred_region
          %337 = dma.done [#allocation6], 8192
        $region60: #{tpu_custom_call.1} parent=47 // pred_fallthru
          _
        // Predicated region
        $region61: #{tpu_custom_call.1} parent=47 // pred_check
          %p338 = pneg %p111
        $region62: #{tpu_custom_call.1} parent=47 // pred_check_branch
          %340 = sbr.rel (%p338) target = $region64
        $region63: #{tpu_custom_call.1} parent=47 // pred_region
          %341 = dma.done [#allocation9], 2048
        $region64: #{tpu_custom_call.1} parent=47 // pred_fallthru
          _
        // Predicated region
        $region65: #{tpu_custom_call.1} parent=47 // pred_check
          %p342 = pneg %p132
        $region66: #{tpu_custom_call.1} parent=47 // pred_check_branch
          %344 = sbr.rel (%p342) target = $region68
        $region67: #{tpu_custom_call.1} parent=47 // pred_region
          %345 = dma.done [#allocation9], 256
        $region68: #{tpu_custom_call.1} parent=47 // pred_fallthru
          _
        // Predicated region
        $region69: #{tpu_custom_call.1} parent=47 // pred_check
          %p346 = pneg %p153
        $region70: #{tpu_custom_call.1} parent=47 // pred_check_branch
          %348 = sbr.rel (%p346) target = $region72
        $region71: #{tpu_custom_call.1} parent=47 // pred_region
          %349 = dma.done [#allocation12], 4096
        $region72: #{tpu_custom_call.1} parent=47 // pred_fallthru
          _
        // Predicated region
        $region73: #{tpu_custom_call.1} parent=47 // pred_check
          %p350 = pneg %p174
        $region74: #{tpu_custom_call.1} parent=47 // pred_check_branch
          %352 = sbr.rel (%p350) target = $region76
        $region75: #{tpu_custom_call.1} parent=47 // pred_region
          %353 = dma.done [#allocation12], 2048
        $region76: #{tpu_custom_call.1} parent=47 // pred_fallthru
          _
        %s354 = sand.u32 %s35, 1
        %s355 = scalar_lea.sflag [#allocation3], %s354
        %s356 = sand.u32 %s35, 1
        %s357 = smul.addr %s356, 24
        %s358 = scalar_lea.vmem [#allocation2], %s357
        %p359 = pneg %p48
        %p360 = pneg %p45
        %p361 = pneg %p69
        %p362 = pneg %p66
        %p363 = pneg %p90
        %p364 = pneg %p87
        %p365 = pneg %p111
        %p366 = pneg %p108
        %p367 = pneg %p132
        %p368 = pneg %p129
        %p369 = pneg %p153
        %p370 = pneg %p150
        %p371 = pneg %p174
        %p372 = pneg %p171
        %p373 = pneg %p200
        %p374 = pneg %p197
        %s375 = sand.u32 %s187, 1
        %s376 = scalar_lea.sflag [#allocation4], %s375
        %s377 = sand.u32 %s187, 1
        %s378 = smul.addr %s377, 56
        %s379 = scalar_lea.vmem [#allocation14], %s378
        %v380 = vld [vmem:[%s325] sm:$0xff]
        %v381 = vld [vmem:[#allocation5] sm:$0xff]
        %v382 = vld [vmem:[#allocation5 + $0x8] sm:$0xff]
        %v383 = vld [vmem:[#allocation5 + $0x10] sm:$0xff]
        %v384 = vld [vmem:[#allocation5 + $0x18] sm:$0xff]
        %v385 = vld [vmem:[#allocation5 + $0x20] sm:$0xff]
        %v386 = vld [vmem:[#allocation5 + $0x28] sm:$0xff]
        %v387 = vld [vmem:[#allocation5 + $0x30] sm:$0xff]
        %v388 = vld [vmem:[#allocation5 + $0x38] sm:$0xff]
        %v389 = vld [vmem:[#allocation5 + $0x40] sm:$0xff]
        %v390 = vld [vmem:[#allocation5 + $0x48] sm:$0xff]
        %v391 = vld [vmem:[#allocation5 + $0x50] sm:$0xff]
        %v392 = vld [vmem:[#allocation5 + $0x58] sm:$0xff]
        %v393 = vld [vmem:[#allocation5 + $0x60] sm:$0xff]
        %v394 = vld [vmem:[#allocation5 + $0x68] sm:$0xff]
        %v395 = vld [vmem:[#allocation5 + $0x70] sm:$0xff]
        %v396 = vld [vmem:[#allocation5 + $0x78] sm:$0xff]
        %v397 = vld [vmem:[#allocation10] ss:$0 sm:$0xff]
        %398 = vmatprep.subr.mxu0 0.0
        %399 = vmatpush1.msra.mxu0 %v396
        %400 = vmatprep.subr.mxu0 0.0
        %401 = vmatpush1.msra.mxu0 %v395
        %402 = vmatprep.subr.mxu0 0.0
        %403 = vmatpush1.msra.mxu0 %v394
        %404 = vmatprep.subr.mxu0 0.0
        %405 = vmatpush1.msra.mxu0 %v393
        %406 = vmatprep.subr.mxu0 0.0
        %407 = vmatpush1.msra.mxu0 %v392
        %408 = vmatprep.subr.mxu0 0.0
        %409 = vmatpush1.msra.mxu0 %v391
        %410 = vmatprep.subr.mxu0 0.0
        %411 = vmatpush1.msra.mxu0 %v390
        %412 = vmatprep.subr.mxu0 0.0
        %413 = vmatpush1.msra.mxu0 %v389
        %414 = vmatprep.subr.mxu0 0.0
        %415 = vmatpush1.msra.mxu0 %v388
        %416 = vmatprep.subr.mxu0 0.0
        %417 = vmatpush1.msra.mxu0 %v387
        %418 = vmatprep.subr.mxu0 0.0
        %419 = vmatpush1.msra.mxu0 %v386
        %420 = vmatprep.subr.mxu0 0.0
        %421 = vmatpush1.msra.mxu0 %v385
        %422 = vmatprep.subr.mxu0 0.0
        %423 = vmatpush1.msra.mxu0 %v384
        %424 = vmatprep.subr.mxu0 0.0
        %425 = vmatpush1.msra.mxu0 %v383
        %426 = vmatprep.subr.mxu0 0.0
        %427 = vmatpush1.msra.mxu0 %v382
        %428 = vmatprep.subr.mxu0 0.0
        %429 = vmatpush1.msra.mxu0 %v381
        %430 = vmatprep.subr.mxu0 0.0
        %431 = vmatpush2.msra.mxu0 0.0
        %432 = vmatprep.subr.mxu0 0.0
        %433 = vmatpush2.msra.mxu0 0.0
        %434 = vmatprep.subr.mxu0 0.0
        %435 = vmatpush2.msra.mxu0 0.0
        %436 = vmatprep.subr.mxu0 0.0
        %437 = vmatpush2.msra.mxu0 0.0
        %438 = vmatprep.subr.mxu0 0.0
        %439 = vmatpush2.msra.mxu0 0.0
        %440 = vmatprep.subr.mxu0 0.0
        %441 = vmatpush2.msra.mxu0 0.0
        %442 = vmatprep.subr.mxu0 0.0
        %443 = vmatpush2.msra.mxu0 0.0
        %444 = vmatprep.subr.mxu0 0.0
        %445 = vmatpush2.msra.mxu0 0.0
        %446 = vmatprep.subr.mxu0 0.0
        %447 = vmatpush2.msra.mxu0 0.0
        %448 = vmatprep.subr.mxu0 0.0
        %449 = vmatpush2.msra.mxu0 0.0
        %450 = vmatprep.subr.mxu0 0.0
        %451 = vmatpush2.msra.mxu0 0.0
        %452 = vmatprep.subr.mxu0 0.0
        %453 = vmatpush2.msra.mxu0 0.0
        %454 = vmatprep.subr.mxu0 0.0
        %455 = vmatpush2.msra.mxu0 0.0
        %456 = vmatprep.subr.mxu0 0.0
        %457 = vmatpush2.msra.mxu0 0.0
        %458 = vmatprep.subr.mxu0 0.0
        %459 = vmatpush2.msra.mxu0 0.0
        %460 = vmatprep.subr.mxu0 0.0
        %461 = vmatpush2.msra.mxu0 0.0
        %462 = vmatprep.mubr.f32.mxu0 0.0
        %463 = vmatmul.mubr.f32.gmra.mxu0 %v380
        %v464 = vpop.f32.mrf.mxu0
        %v465 = vadd.f32 %v397, %v464
        %v466 = vpop.f32.mrf.mxu0
        %467 = vdwg.mxu0
        %v468 = vmax.f32 %v465, 0.0
        %v469 = vld [vmem:[#allocation7] sm:$0xff]
        %v470 = vld [vmem:[#allocation7 + $0x8] sm:$0xff]
        %v471 = vld [vmem:[#allocation7 + $0x10] sm:$0xff]
        %v472 = vld [vmem:[#allocation7 + $0x18] sm:$0xff]
        %v473 = vld [vmem:[#allocation7 + $0x20] sm:$0xff]
        %v474 = vld [vmem:[#allocation7 + $0x28] sm:$0xff]
        %v475 = vld [vmem:[#allocation7 + $0x30] sm:$0xff]
        %v476 = vld [vmem:[#allocation7 + $0x38] sm:$0xff]
        %v477 = vld [vmem:[#allocation7 + $0x40] sm:$0xff]
        %v478 = vld [vmem:[#allocation7 + $0x48] sm:$0xff]
        %v479 = vld [vmem:[#allocation7 + $0x50] sm:$0xff]
        %v480 = vld [vmem:[#allocation7 + $0x58] sm:$0xff]
        %v481 = vld [vmem:[#allocation7 + $0x60] sm:$0xff]
        %v482 = vld [vmem:[#allocation7 + $0x68] sm:$0xff]
        %v483 = vld [vmem:[#allocation7 + $0x70] sm:$0xff]
        %v484 = vld [vmem:[#allocation7 + $0x78] sm:$0xff]
        %v485 = vld [vmem:[#allocation7 + $0x80] sm:$0xff]
        %v486 = vld [vmem:[#allocation7 + $0x88] sm:$0xff]
        %v487 = vld [vmem:[#allocation7 + $0x90] sm:$0xff]
        %v488 = vld [vmem:[#allocation7 + $0x98] sm:$0xff]
        %v489 = vld [vmem:[#allocation7 + $0xa0] sm:$0xff]
        %v490 = vld [vmem:[#allocation7 + $0xa8] sm:$0xff]
        %v491 = vld [vmem:[#allocation7 + $0xb0] sm:$0xff]
        %v492 = vld [vmem:[#allocation7 + $0xb8] sm:$0xff]
        %v493 = vld [vmem:[#allocation7 + $0xc0] sm:$0xff]
        %v494 = vld [vmem:[#allocation7 + $0xc8] sm:$0xff]
        %v495 = vld [vmem:[#allocation7 + $0xd0] sm:$0xff]
        %v496 = vld [vmem:[#allocation7 + $0xd8] sm:$0xff]
        %v497 = vld [vmem:[#allocation7 + $0xe0] sm:$0xff]
        %v498 = vld [vmem:[#allocation7 + $0xe8] sm:$0xff]
        %v499 = vld [vmem:[#allocation7 + $0xf0] sm:$0xff]
        %v500 = vld [vmem:[#allocation7 + $0xf8] sm:$0xff]
        %s501 = scalar_lea.vmem [#allocation10], 2
        %v502 = vld [vmem:[%s501] ss:$8 sm:$0x3]
        %v504 = vlaneseq
        %v505 = vshrl.u32 %v504, 7
        %v506 = vsub.s32 0, %v505
        %v507 = vrot.slane %v502, %v506
        %v508 = vlaneseq
        %v509 = vshrl.u32 %v508, 7
        %v510 = vsub.s32 1, %v509
        %v511 = vrot.slane %v502, %v510
        %514 = vmatprep.subr.mxu0 %v500
        %515 = vmatpush1.msra.mxu0 %v499
        %516 = vmatprep.subr.mxu0 %v498
        %517 = vmatpush1.msra.mxu0 %v497
        %518 = vmatprep.subr.mxu0 %v496
        %519 = vmatpush1.msra.mxu0 %v495
        %520 = vmatprep.subr.mxu0 %v494
        %521 = vmatpush1.msra.mxu0 %v493
        %522 = vmatprep.subr.mxu0 %v492
        %523 = vmatpush1.msra.mxu0 %v491
        %524 = vmatprep.subr.mxu0 %v490
        %525 = vmatpush1.msra.mxu0 %v489
        %526 = vmatprep.subr.mxu0 %v488
        %527 = vmatpush1.msra.mxu0 %v487
        %528 = vmatprep.subr.mxu0 %v486
        %529 = vmatpush1.msra.mxu0 %v485
        %530 = vmatprep.subr.mxu0 %v484
        %531 = vmatpush1.msra.mxu0 %v483
        %532 = vmatprep.subr.mxu0 %v482
        %533 = vmatpush1.msra.mxu0 %v481
        %534 = vmatprep.subr.mxu0 %v480
        %535 = vmatpush1.msra.mxu0 %v479
        %536 = vmatprep.subr.mxu0 %v478
        %537 = vmatpush1.msra.mxu0 %v477
        %538 = vmatprep.subr.mxu0 %v476
        %539 = vmatpush1.msra.mxu0 %v475
        %540 = vmatprep.subr.mxu0 %v474
        %541 = vmatpush1.msra.mxu0 %v473
        %542 = vmatprep.subr.mxu0 %v472
        %543 = vmatpush1.msra.mxu0 %v471
        %544 = vmatprep.subr.mxu0 %v470
        %545 = vmatpush1.msra.mxu0 %v469
        %546 = vmatprep.subr.mxu0 0.0
        %547 = vmatpush2.msra.mxu0 0.0
        %548 = vmatprep.subr.mxu0 0.0
        %549 = vmatpush2.msra.mxu0 0.0
        %550 = vmatprep.subr.mxu0 0.0
        %551 = vmatpush2.msra.mxu0 0.0
        %552 = vmatprep.subr.mxu0 0.0
        %553 = vmatpush2.msra.mxu0 0.0
        %554 = vmatprep.subr.mxu0 0.0
        %555 = vmatpush2.msra.mxu0 0.0
        %556 = vmatprep.subr.mxu0 0.0
        %557 = vmatpush2.msra.mxu0 0.0
        %558 = vmatprep.subr.mxu0 0.0
        %559 = vmatpush2.msra.mxu0 0.0
        %560 = vmatprep.subr.mxu0 0.0
        %561 = vmatpush2.msra.mxu0 0.0
        %562 = vmatprep.subr.mxu0 0.0
        %563 = vmatpush2.msra.mxu0 0.0
        %564 = vmatprep.subr.mxu0 0.0
        %565 = vmatpush2.msra.mxu0 0.0
        %566 = vmatprep.subr.mxu0 0.0
        %567 = vmatpush2.msra.mxu0 0.0
        %568 = vmatprep.subr.mxu0 0.0
        %569 = vmatpush2.msra.mxu0 0.0
        %570 = vmatprep.subr.mxu0 0.0
        %571 = vmatpush2.msra.mxu0 0.0
        %572 = vmatprep.subr.mxu0 0.0
        %573 = vmatpush2.msra.mxu0 0.0
        %574 = vmatprep.subr.mxu0 0.0
        %575 = vmatpush2.msra.mxu0 0.0
        %576 = vmatprep.subr.mxu0 0.0
        %577 = vmatpush2.msra.mxu0 0.0
        %578 = vmatprep.mubr.f32.mxu0 0.0
        %579 = vmatmul.mubr.f32.gmra.mxu0 %v468
        %v580 = vpop.f32.mrf.mxu0
        %v581 = vadd.f32 %v507, %v580
        %v582 = vpop.f32.mrf.mxu0
        %v583 = vadd.f32 %v511, %v582
        %584 = vdwg.mxu0
        %v585 = vld [vmem:[%s325 + $0x8] sm:$0xff]
        %v586 = vmul.f32 %v583, 0.5
        %v587 = vmul.f32 %v586, 1.442695
        %v588 = vpow.pop %v587
        %v589 = vmul.f32 %v585, %v588
        %v590 = vadd.f32 %v581, %v589
        %591 = vst [vmem:[%s379 + $0x8] sm:$0xff] %v581
        %592 = vst [vmem:[%s379 + $0x18] sm:$0xff] %v583
        %593 = vst [vmem:[%s379 + $0x28] sm:$0xff] %v590
        %v594 = vld [vmem:[#allocation11] sm:$0xff]
        %v595 = vld [vmem:[#allocation11 + $0x8] sm:$0xff]
        %v596 = vld [vmem:[#allocation11 + $0x10] sm:$0xff]
        %v597 = vld [vmem:[#allocation11 + $0x18] sm:$0xff]
        %v598 = vld [vmem:[#allocation11 + $0x20] sm:$0xff]
        %v599 = vld [vmem:[#allocation11 + $0x28] sm:$0xff]
        %v600 = vld [vmem:[#allocation11 + $0x30] sm:$0xff]
        %v601 = vld [vmem:[#allocation11 + $0x38] sm:$0xff]
        %v602 = vld [vmem:[#allocation11 + $0x40] sm:$0xff]
        %v603 = vld [vmem:[#allocation11 + $0x48] sm:$0xff]
        %v604 = vld [vmem:[#allocation11 + $0x50] sm:$0xff]
        %v605 = vld [vmem:[#allocation11 + $0x58] sm:$0xff]
        %v606 = vld [vmem:[#allocation11 + $0x60] sm:$0xff]
        %v607 = vld [vmem:[#allocation11 + $0x68] sm:$0xff]
        %v608 = vld [vmem:[#allocation11 + $0x70] sm:$0xff]
        %v609 = vld [vmem:[#allocation11 + $0x78] sm:$0xff]
        %v610 = vld [vmem:[#allocation10 + $0x1] ss:$0 sm:$0xff]
        %611 = vmatprep.subr.mxu0 0.0
        %612 = vmatpush1.msra.mxu0 %v609
        %613 = vmatprep.subr.mxu0 0.0
        %614 = vmatpush1.msra.mxu0 %v608
        %615 = vmatprep.subr.mxu0 0.0
        %616 = vmatpush1.msra.mxu0 %v607
        %617 = vmatprep.subr.mxu0 0.0
        %618 = vmatpush1.msra.mxu0 %v606
        %619 = vmatprep.subr.mxu0 0.0
        %620 = vmatpush1.msra.mxu0 %v605
        %621 = vmatprep.subr.mxu0 0.0
        %622 = vmatpush1.msra.mxu0 %v604
        %623 = vmatprep.subr.mxu0 0.0
        %624 = vmatpush1.msra.mxu0 %v603
        %625 = vmatprep.subr.mxu0 0.0
        %626 = vmatpush1.msra.mxu0 %v602
        %627 = vmatprep.subr.mxu0 0.0
        %628 = vmatpush1.msra.mxu0 %v601
        %629 = vmatprep.subr.mxu0 0.0
        %630 = vmatpush1.msra.mxu0 %v600
        %631 = vmatprep.subr.mxu0 0.0
        %632 = vmatpush1.msra.mxu0 %v599
        %633 = vmatprep.subr.mxu0 0.0
        %634 = vmatpush1.msra.mxu0 %v598
        %635 = vmatprep.subr.mxu0 0.0
        %636 = vmatpush1.msra.mxu0 %v597
        %637 = vmatprep.subr.mxu0 0.0
        %638 = vmatpush1.msra.mxu0 %v596
        %639 = vmatprep.subr.mxu0 0.0
        %640 = vmatpush1.msra.mxu0 %v595
        %641 = vmatprep.subr.mxu0 0.0
        %642 = vmatpush1.msra.mxu0 %v594
        %643 = vmatprep.subr.mxu0 0.0
        %644 = vmatpush2.msra.mxu0 0.0
        %645 = vmatprep.subr.mxu0 0.0
        %646 = vmatpush2.msra.mxu0 0.0
        %647 = vmatprep.subr.mxu0 0.0
        %648 = vmatpush2.msra.mxu0 0.0
        %649 = vmatprep.subr.mxu0 0.0
        %650 = vmatpush2.msra.mxu0 0.0
        %651 = vmatprep.subr.mxu0 0.0
        %652 = vmatpush2.msra.mxu0 0.0
        %653 = vmatprep.subr.mxu0 0.0
        %654 = vmatpush2.msra.mxu0 0.0
        %655 = vmatprep.subr.mxu0 0.0
        %656 = vmatpush2.msra.mxu0 0.0
        %657 = vmatprep.subr.mxu0 0.0
        %658 = vmatpush2.msra.mxu0 0.0
        %659 = vmatprep.subr.mxu0 0.0
        %660 = vmatpush2.msra.mxu0 0.0
        %661 = vmatprep.subr.mxu0 0.0
        %662 = vmatpush2.msra.mxu0 0.0
        %663 = vmatprep.subr.mxu0 0.0
        %664 = vmatpush2.msra.mxu0 0.0
        %665 = vmatprep.subr.mxu0 0.0
        %666 = vmatpush2.msra.mxu0 0.0
        %667 = vmatprep.subr.mxu0 0.0
        %668 = vmatpush2.msra.mxu0 0.0
        %669 = vmatprep.subr.mxu0 0.0
        %670 = vmatpush2.msra.mxu0 0.0
        %671 = vmatprep.subr.mxu0 0.0
        %672 = vmatpush2.msra.mxu0 0.0
        %673 = vmatprep.subr.mxu0 0.0
        %674 = vmatpush2.msra.mxu0 0.0
        %675 = vmatprep.mubr.f32.mxu0 0.0
        %676 = vmatmul.mubr.f32.gmra.mxu0 %v581
        %v677 = vpop.f32.mrf.mxu0
        %v678 = vadd.f32 %v610, %v677
        %v679 = vpop.f32.mrf.mxu0
        %680 = vdwg.mxu0
        %v681 = vmax.f32 %v678, 0.0
        %s682 = scalar_lea.vmem [#allocation7], 256
        %v683 = vld [vmem:[%s682] sm:$0xff]
        %v684 = vld [vmem:[%s682 + $0x8] sm:$0xff]
        %v685 = vld [vmem:[%s682 + $0x10] sm:$0xff]
        %v686 = vld [vmem:[%s682 + $0x18] sm:$0xff]
        %v687 = vld [vmem:[%s682 + $0x20] sm:$0xff]
        %v688 = vld [vmem:[%s682 + $0x28] sm:$0xff]
        %v689 = vld [vmem:[%s682 + $0x30] sm:$0xff]
        %v690 = vld [vmem:[%s682 + $0x38] sm:$0xff]
        %v691 = vld [vmem:[%s682 + $0x40] sm:$0xff]
        %v692 = vld [vmem:[%s682 + $0x48] sm:$0xff]
        %v693 = vld [vmem:[%s682 + $0x50] sm:$0xff]
        %v694 = vld [vmem:[%s682 + $0x58] sm:$0xff]
        %v695 = vld [vmem:[%s682 + $0x60] sm:$0xff]
        %v696 = vld [vmem:[%s682 + $0x68] sm:$0xff]
        %v697 = vld [vmem:[%s682 + $0x70] sm:$0xff]
        %v698 = vld [vmem:[%s682 + $0x78] sm:$0xff]
        %v699 = vld [vmem:[%s682 + $0x80] sm:$0xff]
        %v700 = vld [vmem:[%s682 + $0x88] sm:$0xff]
        %v701 = vld [vmem:[%s682 + $0x90] sm:$0xff]
        %v702 = vld [vmem:[%s682 + $0x98] sm:$0xff]
        %v703 = vld [vmem:[%s682 + $0xa0] sm:$0xff]
        %v704 = vld [vmem:[%s682 + $0xa8] sm:$0xff]
        %v705 = vld [vmem:[%s682 + $0xb0] sm:$0xff]
        %v706 = vld [vmem:[%s682 + $0xb8] sm:$0xff]
        %v707 = vld [vmem:[%s682 + $0xc0] sm:$0xff]
        %v708 = vld [vmem:[%s682 + $0xc8] sm:$0xff]
        %v709 = vld [vmem:[%s682 + $0xd0] sm:$0xff]
        %v710 = vld [vmem:[%s682 + $0xd8] sm:$0xff]
        %v711 = vld [vmem:[%s682 + $0xe0] sm:$0xff]
        %v712 = vld [vmem:[%s682 + $0xe8] sm:$0xff]
        %v713 = vld [vmem:[%s682 + $0xf0] sm:$0xff]
        %v714 = vld [vmem:[%s682 + $0xf8] sm:$0xff]
        %s715 = scalar_lea.vmem [#allocation10], 3
        %v716 = vld [vmem:[%s715] ss:$8 sm:$0x3]
        %v718 = vlaneseq
        %v719 = vshrl.u32 %v718, 7
        %v720 = vsub.s32 0, %v719
        %v721 = vrot.slane %v716, %v720
        %v722 = vlaneseq
        %v723 = vshrl.u32 %v722, 7
        %v724 = vsub.s32 1, %v723
        %v725 = vrot.slane %v716, %v724
        %728 = vmatprep.subr.mxu0 %v714
        %729 = vmatpush1.msra.mxu0 %v713
        %730 = vmatprep.subr.mxu0 %v712
        %731 = vmatpush1.msra.mxu0 %v711
        %732 = vmatprep.subr.mxu0 %v710
        %733 = vmatpush1.msra.mxu0 %v709
        %734 = vmatprep.subr.mxu0 %v708
        %735 = vmatpush1.msra.mxu0 %v707
        %736 = vmatprep.subr.mxu0 %v706
        %737 = vmatpush1.msra.mxu0 %v705
        %738 = vmatprep.subr.mxu0 %v704
        %739 = vmatpush1.msra.mxu0 %v703
        %740 = vmatprep.subr.mxu0 %v702
        %741 = vmatpush1.msra.mxu0 %v701
        %742 = vmatprep.subr.mxu0 %v700
        %743 = vmatpush1.msra.mxu0 %v699
        %744 = vmatprep.subr.mxu0 %v698
        %745 = vmatpush1.msra.mxu0 %v697
        %746 = vmatprep.subr.mxu0 %v696
        %747 = vmatpush1.msra.mxu0 %v695
        %748 = vmatprep.subr.mxu0 %v694
        %749 = vmatpush1.msra.mxu0 %v693
        %750 = vmatprep.subr.mxu0 %v692
        %751 = vmatpush1.msra.mxu0 %v691
        %752 = vmatprep.subr.mxu0 %v690
        %753 = vmatpush1.msra.mxu0 %v689
        %754 = vmatprep.subr.mxu0 %v688
        %755 = vmatpush1.msra.mxu0 %v687
        %756 = vmatprep.subr.mxu0 %v686
        %757 = vmatpush1.msra.mxu0 %v685
        %758 = vmatprep.subr.mxu0 %v684
        %759 = vmatpush1.msra.mxu0 %v683
        %760 = vmatprep.subr.mxu0 0.0
        %761 = vmatpush2.msra.mxu0 0.0
        %762 = vmatprep.subr.mxu0 0.0
        %763 = vmatpush2.msra.mxu0 0.0
        %764 = vmatprep.subr.mxu0 0.0
        %765 = vmatpush2.msra.mxu0 0.0
        %766 = vmatprep.subr.mxu0 0.0
        %767 = vmatpush2.msra.mxu0 0.0
        %768 = vmatprep.subr.mxu0 0.0
        %769 = vmatpush2.msra.mxu0 0.0
        %770 = vmatprep.subr.mxu0 0.0
        %771 = vmatpush2.msra.mxu0 0.0
        %772 = vmatprep.subr.mxu0 0.0
        %773 = vmatpush2.msra.mxu0 0.0
        %774 = vmatprep.subr.mxu0 0.0
        %775 = vmatpush2.msra.mxu0 0.0
        %776 = vmatprep.subr.mxu0 0.0
        %777 = vmatpush2.msra.mxu0 0.0
        %778 = vmatprep.subr.mxu0 0.0
        %779 = vmatpush2.msra.mxu0 0.0
        %780 = vmatprep.subr.mxu0 0.0
        %781 = vmatpush2.msra.mxu0 0.0
        %782 = vmatprep.subr.mxu0 0.0
        %783 = vmatpush2.msra.mxu0 0.0
        %784 = vmatprep.subr.mxu0 0.0
        %785 = vmatpush2.msra.mxu0 0.0
        %786 = vmatprep.subr.mxu0 0.0
        %787 = vmatpush2.msra.mxu0 0.0
        %788 = vmatprep.subr.mxu0 0.0
        %789 = vmatpush2.msra.mxu0 0.0
        %790 = vmatprep.subr.mxu0 0.0
        %791 = vmatpush2.msra.mxu0 0.0
        %792 = vmatprep.mubr.f32.mxu0 0.0
        %793 = vmatmul.mubr.f32.gmra.mxu0 %v681
        %v794 = vpop.f32.mrf.mxu0
        %v795 = vadd.f32 %v721, %v794
        %v796 = vpop.f32.mrf.mxu0
        %v797 = vadd.f32 %v725, %v796
        %798 = vdwg.mxu0
        %v799 = vld [vmem:[%s325 + $0x10] sm:$0xff]
        %v800 = vmul.f32 %v797, 0.5
        %v801 = vmul.f32 %v800, 1.442695
        %v802 = vpow.pop %v801
        %v803 = vmul.f32 %v799, %v802
        %v804 = vadd.f32 %v795, %v803
        %805 = vst [vmem:[%s379 + $0x10] sm:$0xff] %v795
        %806 = vst [vmem:[%s379 + $0x20] sm:$0xff] %v797
        %807 = vst [vmem:[%s379 + $0x30] sm:$0xff] %v804
        %s808 = scalar_lea.vmem [#allocation11], 128
        %v809 = vld [vmem:[%s808] sm:$0xff]
        %v810 = vld [vmem:[%s808 + $0x8] sm:$0xff]
        %v811 = vld [vmem:[%s808 + $0x10] sm:$0xff]
        %v812 = vld [vmem:[%s808 + $0x18] sm:$0xff]
        %v813 = vld [vmem:[%s808 + $0x20] sm:$0xff]
        %v814 = vld [vmem:[%s808 + $0x28] sm:$0xff]
        %v815 = vld [vmem:[%s808 + $0x30] sm:$0xff]
        %v816 = vld [vmem:[%s808 + $0x38] sm:$0xff]
        %v817 = vld [vmem:[%s808 + $0x40] sm:$0xff]
        %v818 = vld [vmem:[%s808 + $0x48] sm:$0xff]
        %v819 = vld [vmem:[%s808 + $0x50] sm:$0xff]
        %v820 = vld [vmem:[%s808 + $0x58] sm:$0xff]
        %v821 = vld [vmem:[%s808 + $0x60] sm:$0xff]
        %v822 = vld [vmem:[%s808 + $0x68] sm:$0xff]
        %v823 = vld [vmem:[%s808 + $0x70] sm:$0xff]
        %v824 = vld [vmem:[%s808 + $0x78] sm:$0xff]
        %v825 = vld [vmem:[#allocation10 + $0x4] ss:$0 sm:$0xff]
        %826 = vmatprep.subr.mxu0 0.0
        %827 = vmatpush1.msra.mxu0 %v824
        %828 = vmatprep.subr.mxu0 0.0
        %829 = vmatpush1.msra.mxu0 %v823
        %830 = vmatprep.subr.mxu0 0.0
        %831 = vmatpush1.msra.mxu0 %v822
        %832 = vmatprep.subr.mxu0 0.0
        %833 = vmatpush1.msra.mxu0 %v821
        %834 = vmatprep.subr.mxu0 0.0
        %835 = vmatpush1.msra.mxu0 %v820
        %836 = vmatprep.subr.mxu0 0.0
        %837 = vmatpush1.msra.mxu0 %v819
        %838 = vmatprep.subr.mxu0 0.0
        %839 = vmatpush1.msra.mxu0 %v818
        %840 = vmatprep.subr.mxu0 0.0
        %841 = vmatpush1.msra.mxu0 %v817
        %842 = vmatprep.subr.mxu0 0.0
        %843 = vmatpush1.msra.mxu0 %v816
        %844 = vmatprep.subr.mxu0 0.0
        %845 = vmatpush1.msra.mxu0 %v815
        %846 = vmatprep.subr.mxu0 0.0
        %847 = vmatpush1.msra.mxu0 %v814
        %848 = vmatprep.subr.mxu0 0.0
        %849 = vmatpush1.msra.mxu0 %v813
        %850 = vmatprep.subr.mxu0 0.0
        %851 = vmatpush1.msra.mxu0 %v812
        %852 = vmatprep.subr.mxu0 0.0
        %853 = vmatpush1.msra.mxu0 %v811
        %854 = vmatprep.subr.mxu0 0.0
        %855 = vmatpush1.msra.mxu0 %v810
        %856 = vmatprep.subr.mxu0 0.0
        %857 = vmatpush1.msra.mxu0 %v809
        %858 = vmatprep.subr.mxu0 0.0
        %859 = vmatpush2.msra.mxu0 0.0
        %860 = vmatprep.subr.mxu0 0.0
        %861 = vmatpush2.msra.mxu0 0.0
        %862 = vmatprep.subr.mxu0 0.0
        %863 = vmatpush2.msra.mxu0 0.0
        %864 = vmatprep.subr.mxu0 0.0
        %865 = vmatpush2.msra.mxu0 0.0
        %866 = vmatprep.subr.mxu0 0.0
        %867 = vmatpush2.msra.mxu0 0.0
        %868 = vmatprep.subr.mxu0 0.0
        %869 = vmatpush2.msra.mxu0 0.0
        %870 = vmatprep.subr.mxu0 0.0
        %871 = vmatpush2.msra.mxu0 0.0
        %872 = vmatprep.subr.mxu0 0.0
        %873 = vmatpush2.msra.mxu0 0.0
        %874 = vmatprep.subr.mxu0 0.0
        %875 = vmatpush2.msra.mxu0 0.0
        %876 = vmatprep.subr.mxu0 0.0
        %877 = vmatpush2.msra.mxu0 0.0
        %878 = vmatprep.subr.mxu0 0.0
        %879 = vmatpush2.msra.mxu0 0.0
        %880 = vmatprep.subr.mxu0 0.0
        %881 = vmatpush2.msra.mxu0 0.0
        %882 = vmatprep.subr.mxu0 0.0
        %883 = vmatpush2.msra.mxu0 0.0
        %884 = vmatprep.subr.mxu0 0.0
        %885 = vmatpush2.msra.mxu0 0.0
        %886 = vmatprep.subr.mxu0 0.0
        %887 = vmatpush2.msra.mxu0 0.0
        %888 = vmatprep.subr.mxu0 0.0
        %889 = vmatpush2.msra.mxu0 0.0
        %890 = vmatprep.mubr.f32.mxu0 0.0
        %891 = vmatmul.mubr.f32.gmra.mxu0 %v590
        %v892 = vpop.f32.mrf.mxu0
        %v893 = vadd.f32 %v825, %v892
        %v894 = vpop.f32.mrf.mxu0
        %895 = vdwg.mxu0
        %v896 = vmax.f32 %v893, 0.0
        %v897 = vld [vmem:[#allocation13] sm:$0xff]
        %v898 = vld [vmem:[#allocation13 + $0x8] sm:$0xff]
        %v899 = vld [vmem:[#allocation13 + $0x10] sm:$0xff]
        %v900 = vld [vmem:[#allocation13 + $0x18] sm:$0xff]
        %v901 = vld [vmem:[#allocation13 + $0x20] sm:$0xff]
        %v902 = vld [vmem:[#allocation13 + $0x28] sm:$0xff]
        %v903 = vld [vmem:[#allocation13 + $0x30] sm:$0xff]
        %v904 = vld [vmem:[#allocation13 + $0x38] sm:$0xff]
        %v905 = vld [vmem:[#allocation13 + $0x40] sm:$0xff]
        %v906 = vld [vmem:[#allocation13 + $0x48] sm:$0xff]
        %v907 = vld [vmem:[#allocation13 + $0x50] sm:$0xff]
        %v908 = vld [vmem:[#allocation13 + $0x58] sm:$0xff]
        %v909 = vld [vmem:[#allocation13 + $0x60] sm:$0xff]
        %v910 = vld [vmem:[#allocation13 + $0x68] sm:$0xff]
        %v911 = vld [vmem:[#allocation13 + $0x70] sm:$0xff]
        %v912 = vld [vmem:[#allocation13 + $0x78] sm:$0xff]
        %v913 = vld [vmem:[#allocation10 + $0x5] ss:$0 sm:$0xff]
        %914 = vmatprep.subr.mxu0 0.0
        %915 = vmatpush1.msra.mxu0 %v912
        %916 = vmatprep.subr.mxu0 0.0
        %917 = vmatpush1.msra.mxu0 %v911
        %918 = vmatprep.subr.mxu0 0.0
        %919 = vmatpush1.msra.mxu0 %v910
        %920 = vmatprep.subr.mxu0 0.0
        %921 = vmatpush1.msra.mxu0 %v909
        %922 = vmatprep.subr.mxu0 0.0
        %923 = vmatpush1.msra.mxu0 %v908
        %924 = vmatprep.subr.mxu0 0.0
        %925 = vmatpush1.msra.mxu0 %v907
        %926 = vmatprep.subr.mxu0 0.0
        %927 = vmatpush1.msra.mxu0 %v906
        %928 = vmatprep.subr.mxu0 0.0
        %929 = vmatpush1.msra.mxu0 %v905
        %930 = vmatprep.subr.mxu0 0.0
        %931 = vmatpush1.msra.mxu0 %v904
        %932 = vmatprep.subr.mxu0 0.0
        %933 = vmatpush1.msra.mxu0 %v903
        %934 = vmatprep.subr.mxu0 0.0
        %935 = vmatpush1.msra.mxu0 %v902
        %936 = vmatprep.subr.mxu0 0.0
        %937 = vmatpush1.msra.mxu0 %v901
        %938 = vmatprep.subr.mxu0 0.0
        %939 = vmatpush1.msra.mxu0 %v900
        %940 = vmatprep.subr.mxu0 0.0
        %941 = vmatpush1.msra.mxu0 %v899
        %942 = vmatprep.subr.mxu0 0.0
        %943 = vmatpush1.msra.mxu0 %v898
        %944 = vmatprep.subr.mxu0 0.0
        %945 = vmatpush1.msra.mxu0 %v897
        %946 = vmatprep.subr.mxu0 0.0
        %947 = vmatpush2.msra.mxu0 0.0
        %948 = vmatprep.subr.mxu0 0.0
        %949 = vmatpush2.msra.mxu0 0.0
        %950 = vmatprep.subr.mxu0 0.0
        %951 = vmatpush2.msra.mxu0 0.0
        %952 = vmatprep.subr.mxu0 0.0
        %953 = vmatpush2.msra.mxu0 0.0
        %954 = vmatprep.subr.mxu0 0.0
        %955 = vmatpush2.msra.mxu0 0.0
        %956 = vmatprep.subr.mxu0 0.0
        %957 = vmatpush2.msra.mxu0 0.0
        %958 = vmatprep.subr.mxu0 0.0
        %959 = vmatpush2.msra.mxu0 0.0
        %960 = vmatprep.subr.mxu0 0.0
        %961 = vmatpush2.msra.mxu0 0.0
        %962 = vmatprep.subr.mxu0 0.0
        %963 = vmatpush2.msra.mxu0 0.0
        %964 = vmatprep.subr.mxu0 0.0
        %965 = vmatpush2.msra.mxu0 0.0
        %966 = vmatprep.subr.mxu0 0.0
        %967 = vmatpush2.msra.mxu0 0.0
        %968 = vmatprep.subr.mxu0 0.0
        %969 = vmatpush2.msra.mxu0 0.0
        %970 = vmatprep.subr.mxu0 0.0
        %971 = vmatpush2.msra.mxu0 0.0
        %972 = vmatprep.subr.mxu0 0.0
        %973 = vmatpush2.msra.mxu0 0.0
        %974 = vmatprep.subr.mxu0 0.0
        %975 = vmatpush2.msra.mxu0 0.0
        %976 = vmatprep.subr.mxu0 0.0
        %977 = vmatpush2.msra.mxu0 0.0
        %978 = vmatprep.mubr.f32.mxu0 0.0
        %979 = vmatmul.mubr.f32.gmra.mxu0 %v896
        %v980 = vpop.f32.mrf.mxu0
        %v981 = vadd.f32 %v913, %v980
        %v982 = vpop.f32.mrf.mxu0
        %983 = vdwg.mxu0
        %v984 = vadd.f32 %v795, %v981
        %v985 = vmul.f32 %v984, 0.5
        %v986 = vld [vmem:[#allocation8] sm:$0xff]
        %v987 = vld [vmem:[#allocation8 + $0x8] sm:$0xff]
        %v988 = vld [vmem:[#allocation8 + $0x10] sm:$0xff]
        %v989 = vld [vmem:[#allocation8 + $0x18] sm:$0xff]
        %v990 = vld [vmem:[#allocation8 + $0x20] sm:$0xff]
        %v991 = vld [vmem:[#allocation8 + $0x28] sm:$0xff]
        %v992 = vld [vmem:[#allocation8 + $0x30] sm:$0xff]
        %v993 = vld [vmem:[#allocation8 + $0x38] sm:$0xff]
        %v994 = vld [vmem:[#allocation8 + $0x40] sm:$0xff]
        %v995 = vld [vmem:[#allocation8 + $0x48] sm:$0xff]
        %v996 = vld [vmem:[#allocation8 + $0x50] sm:$0xff]
        %v997 = vld [vmem:[#allocation8 + $0x58] sm:$0xff]
        %v998 = vld [vmem:[#allocation8 + $0x60] sm:$0xff]
        %v999 = vld [vmem:[#allocation8 + $0x68] sm:$0xff]
        %v1000 = vld [vmem:[#allocation8 + $0x70] sm:$0xff]
        %v1001 = vld [vmem:[#allocation8 + $0x78] sm:$0xff]
        %v1002 = vld [vmem:[#allocation10 + $0x6] ss:$0 sm:$0xff]
        %1003 = vmatprep.subr.mxu0 0.0
        %1004 = vmatpush1.msra.mxu0 %v1001
        %1005 = vmatprep.subr.mxu0 0.0
        %1006 = vmatpush1.msra.mxu0 %v1000
        %1007 = vmatprep.subr.mxu0 0.0
        %1008 = vmatpush1.msra.mxu0 %v999
        %1009 = vmatprep.subr.mxu0 0.0
        %1010 = vmatpush1.msra.mxu0 %v998
        %1011 = vmatprep.subr.mxu0 0.0
        %1012 = vmatpush1.msra.mxu0 %v997
        %1013 = vmatprep.subr.mxu0 0.0
        %1014 = vmatpush1.msra.mxu0 %v996
        %1015 = vmatprep.subr.mxu0 0.0
        %1016 = vmatpush1.msra.mxu0 %v995
        %1017 = vmatprep.subr.mxu0 0.0
        %1018 = vmatpush1.msra.mxu0 %v994
        %1019 = vmatprep.subr.mxu0 0.0
        %1020 = vmatpush1.msra.mxu0 %v993
        %1021 = vmatprep.subr.mxu0 0.0
        %1022 = vmatpush1.msra.mxu0 %v992
        %1023 = vmatprep.subr.mxu0 0.0
        %1024 = vmatpush1.msra.mxu0 %v991
        %1025 = vmatprep.subr.mxu0 0.0
        %1026 = vmatpush1.msra.mxu0 %v990
        %1027 = vmatprep.subr.mxu0 0.0
        %1028 = vmatpush1.msra.mxu0 %v989
        %1029 = vmatprep.subr.mxu0 0.0
        %1030 = vmatpush1.msra.mxu0 %v988
        %1031 = vmatprep.subr.mxu0 0.0
        %1032 = vmatpush1.msra.mxu0 %v987
        %1033 = vmatprep.subr.mxu0 0.0
        %1034 = vmatpush1.msra.mxu0 %v986
        %1035 = vmatprep.subr.mxu0 0.0
        %1036 = vmatpush2.msra.mxu0 0.0
        %1037 = vmatprep.subr.mxu0 0.0
        %1038 = vmatpush2.msra.mxu0 0.0
        %1039 = vmatprep.subr.mxu0 0.0
        %1040 = vmatpush2.msra.mxu0 0.0
        %1041 = vmatprep.subr.mxu0 0.0
        %1042 = vmatpush2.msra.mxu0 0.0
        %1043 = vmatprep.subr.mxu0 0.0
        %1044 = vmatpush2.msra.mxu0 0.0
        %1045 = vmatprep.subr.mxu0 0.0
        %1046 = vmatpush2.msra.mxu0 0.0
        %1047 = vmatprep.subr.mxu0 0.0
        %1048 = vmatpush2.msra.mxu0 0.0
        %1049 = vmatprep.subr.mxu0 0.0
        %1050 = vmatpush2.msra.mxu0 0.0
        %1051 = vmatprep.subr.mxu0 0.0
        %1052 = vmatpush2.msra.mxu0 0.0
        %1053 = vmatprep.subr.mxu0 0.0
        %1054 = vmatpush2.msra.mxu0 0.0
        %1055 = vmatprep.subr.mxu0 0.0
        %1056 = vmatpush2.msra.mxu0 0.0
        %1057 = vmatprep.subr.mxu0 0.0
        %1058 = vmatpush2.msra.mxu0 0.0
        %1059 = vmatprep.subr.mxu0 0.0
        %1060 = vmatpush2.msra.mxu0 0.0
        %1061 = vmatprep.subr.mxu0 0.0
        %1062 = vmatpush2.msra.mxu0 0.0
        %1063 = vmatprep.subr.mxu0 0.0
        %1064 = vmatpush2.msra.mxu0 0.0
        %1065 = vmatprep.subr.mxu0 0.0
        %1066 = vmatpush2.msra.mxu0 0.0
        %1067 = vmatprep.mubr.f32.mxu0 0.0
        %1068 = vmatmul.mubr.f32.gmra.mxu0 %v985
        %v1069 = vpop.f32.mrf.mxu0
        %v1070 = vadd.f32 %v1002, %v1069
        %v1071 = vpop.f32.mrf.mxu0
        %1072 = vdwg.mxu0
        %1073 = vst [vmem:[%s379] sm:$0xff] %v1070
        %s1074 = sand.u32 %s187, 1
        %s1075 = scalar_lea.sflag [#allocation4], %s1074
        %s1076 = sand.u32 %s187, 1
        %s1077 = smul.addr %s1076, 56
        %s1078 = scalar_lea.vmem [#allocation14], %s1077
        // Predicated region
        $region77: #{tpu_custom_call.1} parent=47 // pred_check
          %p1079 = pneg %p197
        $region78: #{tpu_custom_call.1} parent=47 // pred_check_branch
          %1081 = sbr.rel (%p1079) target = $region80
        $region79: #{tpu_custom_call.1} parent=47 // pred_region
          %s1083 = ssub.s32 896, 896
          %1084 = vsyncadd %s1075, %s1083
          %s1085 = smul.addr %s27, 7
          %s1086 = smul.addr %s1085, 128
          %s1087 = scalar_lea.hbm %s7, %s1086
          %s1089 = sshll.u32 %s1078, 4
          %s1090 = int_to_ptr.vmem [resolvable:$true] %s1089
          %1092 = dma.vmem_to_hbm [thread:$0]  %s1090, 896, %s1087, %s1075
        $region80: #{tpu_custom_call.1} parent=47 // pred_fallthru
          _
      $region48: #{tpu_custom_call.1} parent=5 // pred_fallthru
        _
      %p1093 = scmp.le.s32.totalorder 2, %s22
      // Predicated region
      $region81: #{tpu_custom_call.1} parent=5 // pred_check
        %p1094 = pneg %p1093
      $region82: #{tpu_custom_call.1} parent=5 // pred_check_branch
        %1096 = sbr.rel (%p1094) target = $region84
      $region83: #{tpu_custom_call.1} parent=5 // pred_region
        %s1097 = ssub.s32 %s22, 2
        // Predicated region
        $region85: #{tpu_custom_call.1} parent=83 // pred_check
          %p1098 = pneg %p203
        $region86: #{tpu_custom_call.1} parent=83 // pred_check_branch
          %1100 = sbr.rel (%p1098) target = $region88
        $region87: #{tpu_custom_call.1} parent=83 // pred_region
          %s1101 = sand.u32 %s188, 1
          %s1102 = scalar_lea.sflag [#allocation4], %s1101
          %s1103 = sand.u32 %s188, 1
          %s1104 = smul.addr %s1103, 56
          %s1105 = scalar_lea.vmem [#allocation14], %s1104
          %1106 = dma.done %s1102, 896
        $region88: #{tpu_custom_call.1} parent=83 // pred_fallthru
          _
      $region84: #{tpu_custom_call.1} parent=5 // pred_fallthru
        _
    $region6: #{tpu_custom_call.1} parent=1 // loop_footer
      %s26 = sadd.s32 1, %s22
    $region7: #{tpu_custom_call.1} parent=1 // loop_footer_branch
      %21 = sbr.rel target = $region3
    $region8: #{tpu_custom_call.1} parent=1 // loop_exit
      _
    %1107 = vsyncpa [#allocation3], 1
    %s1108 = scalar_lea.sflag [#allocation3], 1
    %1109 = vsyncpa %s1108, 1
    %1110 = vsyncpa [#allocation6], 1
    %1111 = vsyncpa [#allocation9], 1
    %1112 = vsyncpa [#allocation12], 1
    %1113 = vsyncpa [#allocation4], 1
    %s1114 = scalar_lea.sflag [#allocation4], 1
    %1115 = vsyncpa %s1114, 1

</llo_original>
